<compile_context>
chip_gen: v7x
topology: tpu7x:2x2x1
jax: 0.10.0
libtpu: 0.0.40
codegen_flags: <defaults>
</compile_context>

<pallas_src>
import functools

import jax
import jax.numpy as jnp
from jax.experimental import pallas as pl
from jax.experimental.pallas import tpu as pltpu


def _round_up(x, m):
    return ((x + m - 1) // m) * m


def decode_loop_kernel(
    # inputs
    tf_ref,       # (G,) int32 SMEM   : 1 -> use teacher token, 0 -> prev argmax
    teach_ref,    # (G, Bp, Ep)       : teacher-token embeddings (lane-padded)
    h0_ref,       # (Bp, Hp)
    c0_ref,       # (Bp, Hp)
    enc_ref,      # (Bp, S, Fp)       : encoder outputs (F lane-padded)
    encpre_ref,   # (Bp, S, Hp)       : encoder_outputs @ W_attn_enc + b (hoisted)
    maskb_ref,    # (Bp, S)           : additive attention bias (0 / -1e10)
    emb_ref,      # (Vp, Ep)          : embedding table (greedy-feedback path)
    awh_ref,      # (Hp, Hp)          : attention weight, hidden part
    v_ref,        # (1, Hp)           : attention vector v
    wcat_ref,     # (Ep+Fp+Hp, 4*Hp)  : LSTM weights stacked [emb|ctx|h] -> gates
    lb_ref,       # (1, 4*Hp)         : LSTM bias (b_ih + b_hh), gate lane-padded
    fcw_ref,      # (Ep+Fp+Hp, Op)    : fc_out weight stacked [emb|ctx|h]
    fcb_ref,      # (1, Op)
    # outputs
    pred_ref,     # (G, Bp, Op)       : per-step logits
    # scratch (state carried across time steps)
    h_sc,         # (Bp, Hp)
    c_sc,         # (Bp, Hp)
    gemb_sc,      # (Bp, Ep)          : greedy-argmax embedding for the next step
    xcat_sc,      # (Bp, Ep+Fp+Hp)    : fused-matmul input staging
    *,
    vocab_size,
    num_steps,
):
    Bp, S, Fp = enc_ref.shape
    Hp = h_sc.shape[1]
    Ep = gemb_sc.shape[1]
    Op = fcb_ref.shape[1]

    h_sc[...] = h0_ref[...]
    c_sc[...] = c0_ref[...]
    gemb_sc[...] = jnp.zeros_like(gemb_sc)

    @pl.loop(0, num_steps)
    def _step(g):
        # ---- input embedding: teacher token or previous greedy argmax --------
        use_teacher = tf_ref[g] != 0
        emb = jnp.where(use_teacher, teach_ref[g], gemb_sc[...])        # (Bp, Ep)

        h = h_sc[...]
        c = c_sc[...]

        # ---- attention ---------------------------------------------------------
        hid_proj = jnp.dot(h, awh_ref[...],
                           preferred_element_type=jnp.float32)          # (Bp, Hp)
        energy = jnp.tanh(hid_proj[:, None, :] + encpre_ref[...])       # (Bp,S,Hp)
        scores = (jnp.sum(energy * v_ref[...].reshape(1, 1, Hp), axis=-1)
                  + maskb_ref[...])                                      # (Bp, S)
        m = jnp.max(scores, axis=1, keepdims=True)
        e = jnp.exp(scores - m)
        attn = e / jnp.sum(e, axis=1, keepdims=True)                     # exact
        context = jnp.sum(attn[:, :, None] * enc_ref[...], axis=1)      # (Bp, Fp)

        # ---- fused LSTM gates: [emb | context | h_old] @ Wcat ------------------
        xcat_sc[:, 0:Ep] = emb
        xcat_sc[:, Ep:Ep + Fp] = context
        xcat_sc[:, Ep + Fp:Ep + Fp + Hp] = h
        gates = (jnp.dot(xcat_sc[...], wcat_ref[...],
                         preferred_element_type=jnp.float32) + lb_ref[...])

        i_g = jax.nn.sigmoid(gates[:, 0 * Hp:1 * Hp])
        f_g = jax.nn.sigmoid(gates[:, 1 * Hp:2 * Hp])
        g_g = jnp.tanh(gates[:, 2 * Hp:3 * Hp])
        o_g = jax.nn.sigmoid(gates[:, 3 * Hp:4 * Hp])

        c_new = f_g * c + i_g * g_g
        h_new = o_g * jnp.tanh(c_new)
        h_sc[...] = h_new
        c_sc[...] = c_new

        # ---- fused fc_out: [emb | context | h_new] @ Wfc ------------------------
        xcat_sc[:, Ep + Fp:Ep + Fp + Hp] = h_new
        logits = (jnp.dot(xcat_sc[...], fcw_ref[...],
                          preferred_element_type=jnp.float32) + fcb_ref[...])
        pred_ref[g] = logits

        # ---- greedy argmax -> embedding for next step (only when needed) ------
        nxt = jnp.minimum(g + 1, num_steps - 1)
        next_greedy = jnp.logical_and(g + 1 < num_steps, tf_ref[nxt] == 0)

        @pl.when(next_greedy)
        def _():
            lane = jax.lax.broadcasted_iota(jnp.int32, (Bp, Op), 1)
            masked = jnp.where(lane < vocab_size, logits, jnp.float32(-1e30))
            mx = jnp.max(masked, axis=1, keepdims=True)
            idx = jnp.min(jnp.where(masked == mx, lane, Op),
                          axis=1, keepdims=True)          # first occurrence
            oh = (lane == idx).astype(jnp.float32)                       # (Bp, Vp)
            gemb_sc[...] = jnp.dot(oh, emb_ref[...],
                                   preferred_element_type=jnp.float32)


def seq2seq_forward(params, src, trg, hidden, cell, encoder_outputs,
                    teacher_forcing_ratio=0.5, key=None):
    """Mirrors Seq2Seq.forward (decode loop), returning outputs (B, T, O).

    src:             (B, S, feat)  -- only used for create_mask (src.sum(-1) != 0)
    trg:             (B, T) int32
    hidden, cell:    (num_layers=1, B, Hd)
    encoder_outputs: (B, S, 2*enc_h)
    """
    B, S, F = encoder_outputs.shape
    T = trg.shape[1]
    G = T - 1
    Hd = hidden.shape[-1]
    E = params["embedding"].shape[1]
    O = params["fc_b"].shape[0]

    Bp = _round_up(max(B, 8), 8)       # sublane-aligned batch
    Hp = _round_up(Hd, 128)            # lane-aligned hidden (per-gate blocks)
    Ep = _round_up(E, 128)             # lane-aligned embedding dim
    Fp = _round_up(F, 128)             # lane-aligned encoder feature dim
    Op = _round_up(O, 128)             # lane-dense output / vocab
    Vp = Op

    # create_mask(src): src.sum(dim=2) != 0  -> additive bias (0 / -1e10)
    mask = (jnp.sum(src, axis=2) != 0)
    mask_bias = jnp.where(mask, 0.0, -1e10).astype(jnp.float32)       # (B, S)
    maskb = jnp.full((Bp, S), -1e10, jnp.float32).at[:B].set(mask_bias)

    # teacher-forcing decisions (decision drawn at iteration t gates the input
    # of iteration t+1; the first decode step always uses trg[:, 0]).
    if key is None:
        key = jax.random.PRNGKey(0)
    u = jax.random.uniform(key, (G,))
    dec_flags = u < teacher_forcing_ratio
    tf_flags = jnp.concatenate(
        [jnp.ones((1,), jnp.bool_), dec_flags[:-1]]).astype(jnp.int32)  # (G,)

    # ---- weight prep: pad / split / stack (layout plumbing, once, outside) ----
    def pad2(a, r, c):
        return jnp.zeros((r, c), jnp.float32).at[:a.shape[0], :a.shape[1]].set(a)

    attn_W = params["attn_W"]                       # (Hd, Hd + F) torch (out, in)
    awh = pad2(attn_W[:, :Hd].T, Hp, Hp)            # (Hp, Hp)
    awe = attn_W[:, Hd:].T                          # (F, Hd)
    ab = params["attn_b"]                           # (Hd,)
    v = pad2(params["attn_v"].reshape(1, Hd), 1, Hp)

    # step-invariant encoder projection + bias, hoisted out of the decode loop
    enc_pre = jnp.einsum("bsf,fh->bsh", encoder_outputs, awe) + ab.reshape(1, 1, Hd)
    enc_pre = jnp.zeros((Bp, S, Hp), jnp.float32).at[:B, :, :Hd].set(enc_pre)

    enc_pad = jnp.zeros((Bp, S, Fp), jnp.float32).at[:B, :, :F].set(encoder_outputs)

    emb_tab = jnp.zeros((Vp, Ep), jnp.float32).at[:O, :E].set(params["embedding"])

    # teacher-token embeddings precomputed (replaces streaming a (G,Bp,Vp) one-hot)
    teach_tok = jnp.zeros((G, Bp), jnp.int32).at[:, :B].set(
        trg[:, :G].T.astype(jnp.int32))
    teach_emb = jnp.take(params["embedding"], teach_tok, axis=0)       # (G, Bp, E)
    teach_emb = jnp.zeros((G, Bp, Ep), jnp.float32).at[:, :, :E].set(teach_emb)

    def gate_pad(W_t):
        # W_t: (in, 4*Hd) in (i,f,g,o) order -> (in, 4*Hp), each gate lane-padded
        In = W_t.shape[0]
        out = jnp.zeros((In, 4 * Hp), jnp.float32)
        for k in range(4):
            out = out.at[:, k * Hp:k * Hp + Hd].set(W_t[:, k * Hd:(k + 1) * Hd])
        return out

    Wih = params["lstm_Wih"].T                      # (E+F, 4Hd), input = [emb|ctx]
    Whh = params["lstm_Whh"].T                      # (Hd, 4Hd)
    # K-stacked LSTM weight in [emb | context | h] order (matches xcat layout)
    wcat = jnp.zeros((Ep + Fp + Hp, 4 * Hp), jnp.float32)
    wcat = wcat.at[0:E].set(gate_pad(Wih[:E]))
    wcat = wcat.at[Ep:Ep + F].set(gate_pad(Wih[E:]))
    wcat = wcat.at[Ep + Fp:Ep + Fp + Hd].set(gate_pad(Whh))
    lb = gate_pad((params["lstm_bih"] + params["lstm_bhh"]).reshape(1, 4 * Hd))

    fc_W = params["fc_W"]                           # (O, Hd + F + E)
    # K-stacked fc_out weight in the same [emb | context | h] order
    fcw = jnp.zeros((Ep + Fp + Hp, Op), jnp.float32)
    fcw = fcw.at[0:E, :O].set(fc_W[:, Hd + F:].T)               # embedded part
    fcw = fcw.at[Ep:Ep + F, :O].set(fc_W[:, Hd:Hd + F].T)       # context part
    fcw = fcw.at[Ep + Fp:Ep + Fp + Hd, :O].set(fc_W[:, :Hd].T)  # hidden part
    fcb = pad2(params["fc_b"].reshape(1, O), 1, Op)

    h0 = jnp.zeros((Bp, Hp), jnp.float32).at[:B, :Hd].set(hidden[-1])
    c0 = jnp.zeros((Bp, Hp), jnp.float32).at[:B, :Hd].set(cell[-1])

    vmem = pl.BlockSpec(memory_space=pltpu.MemorySpace.VMEM)
    smem = pl.BlockSpec(memory_space=pltpu.MemorySpace.SMEM)

    operands = (tf_flags, teach_emb, h0, c0, enc_pad, enc_pre, maskb, emb_tab,
                awh, v, wcat, lb, fcw, fcb)

    # explicit scoped-VMEM limit with headroom (defaults: 16 MiB v5e, 32 MiB v6e/v7x)
    def nbytes(a):
        return int(a.size) * a.dtype.itemsize
    scratch_bytes = 4 * (Bp * Hp + Bp * Hp + Bp * Ep + Bp * (Ep + Fp + Hp))
    needed = sum(nbytes(a) for a in operands) + G * Bp * Op * 4 + scratch_bytes
    vmem_limit = int(min(max(2 * needed + (4 << 20), 16 << 20), 48 << 20))

    kernel = functools.partial(decode_loop_kernel, vocab_size=O, num_steps=G)

    pred_steps = pl.pallas_call(
        kernel,
        out_shape=jax.ShapeDtypeStruct((G, Bp, Op), jnp.float32),
        in_specs=[smem] + [vmem] * 13,
        out_specs=vmem,
        scratch_shapes=[
            pltpu.VMEM((Bp, Hp), jnp.float32),            # h carried across steps
            pltpu.VMEM((Bp, Hp), jnp.float32),            # c carried across steps
            pltpu.VMEM((Bp, Ep), jnp.float32),            # greedy embedding feedback
            pltpu.VMEM((Bp, Ep + Fp + Hp), jnp.float32),  # fused-matmul staging
        ],
        compiler_params=pltpu.CompilerParams(vmem_limit_bytes=vmem_limit),
    )(*operands)

    outputs = jnp.zeros((B, T, O), jnp.float32)
    outputs = outputs.at[:, 1:, :].set(
        jnp.transpose(pred_steps[:, :B, :O], (1, 0, 2)))
    return outputs


def init_params(key, output_dim, embed_dim, enc_h, dec_h):
    F = 2 * enc_h
    ks = jax.random.split(key, 10)
    u = lambda k, shape, s=0.1: jax.random.uniform(k, shape, jnp.float32, -s, s)
    return {
        "embedding": u(ks[0], (output_dim, embed_dim), 1.0),
        "attn_W":    u(ks[1], (dec_h, dec_h + F)),           # nn.Linear(F+Hd, Hd).weight
        "attn_b":    u(ks[2], (dec_h,)),
        "attn_v":    jax.random.uniform(ks[3], (dec_h,), jnp.float32, 0.0, 1.0),
        "lstm_Wih":  u(ks[4], (4 * dec_h, embed_dim + F)),
        "lstm_Whh":  u(ks[5], (4 * dec_h, dec_h)),
        "lstm_bih":  u(ks[6], (4 * dec_h,)),
        "lstm_bhh":  u(ks[7], (4 * dec_h,)),
        "fc_W":      u(ks[8], (output_dim, dec_h + F + embed_dim)),
        "fc_b":      u(ks[9], (output_dim,)),
    }


if __name__ == "__main__":
    B, S, T = 2, 8, 6
    output_dim, embed_dim, enc_h, dec_h = 40, 32, 16, 32

    key = jax.random.PRNGKey(0)
    kp, k1, k2, k3, k4, k5, ktf = jax.random.split(key, 7)

    params = init_params(kp, output_dim, embed_dim, enc_h, dec_h)

    # synthetic encoder-side tensors (encoder LSTM itself is not specified in
    # the module; the Pallas kernel fuses the full decode loop that consumes them)
    src = jax.random.normal(k1, (B, S, 4), jnp.float32)
    src = src.at[1, S - 3:, :].set(0.0)      # padded positions in batch element 1
    hidden = jax.random.normal(k2, (1, B, dec_h), jnp.float32)
    cell = jax.random.normal(k3, (1, B, dec_h), jnp.float32)
    encoder_outputs = jax.random.normal(k4, (B, S, 2 * enc_h), jnp.float32)
    trg = jax.random.randint(k5, (B, T), 0, output_dim, dtype=jnp.int32)

    outputs = seq2seq_forward(params, src, trg, hidden, cell, encoder_outputs,
                              teacher_forcing_ratio=0.5, key=ktf)
    jax.block_until_ready(outputs)

    assert outputs.shape == (B, T, output_dim)
    assert bool(jnp.all(outputs[:, 0, :] == 0.0))        # outputs[:, 0] stays zero
    assert bool(jnp.all(jnp.isfinite(outputs)))

    print("KERNEL_OK")
</pallas_src>

<mosaic_0001>
module attributes {stable_mosaic.version = 11 : i64} {
  func.func @decode_loop_kernel(%arg0: memref<5xi32, #tpu.memory_space<smem>>, %arg1: memref<5x8x128xf32, #tpu.memory_space<vmem>>, %arg2: memref<8x128xf32, #tpu.memory_space<vmem>>, %arg3: memref<8x128xf32, #tpu.memory_space<vmem>>, %arg4: memref<8x8x128xf32, #tpu.memory_space<vmem>>, %arg5: memref<8x8x128xf32, #tpu.memory_space<vmem>>, %arg6: memref<8x8xf32, #tpu.memory_space<vmem>>, %arg7: memref<128x128xf32, #tpu.memory_space<vmem>>, %arg8: memref<128x128xf32, #tpu.memory_space<vmem>>, %arg9: memref<1x128xf32, #tpu.memory_space<vmem>>, %arg10: memref<384x512xf32, #tpu.memory_space<vmem>>, %arg11: memref<1x512xf32, #tpu.memory_space<vmem>>, %arg12: memref<384x128xf32, #tpu.memory_space<vmem>>, %arg13: memref<1x128xf32, #tpu.memory_space<vmem>>, %arg14: memref<5x8x128xf32, #tpu.memory_space<vmem>>, %arg15: memref<8x128xf32, #tpu.memory_space<vmem>>, %arg16: memref<8x128xf32, #tpu.memory_space<vmem>>, %arg17: memref<8x128xf32, #tpu.memory_space<vmem>>, %arg18: memref<8x384xf32, #tpu.memory_space<vmem>>) attributes {dimension_semantics = [], scalar_prefetch = 0 : i64, scratch_operands = 4 : i64, tpu.core_type = #tpu.core_type<tc>} {
    %c0 = arith.constant 0 : index
    %c0_0 = arith.constant 0 : index
    %0 = vector.load %arg2[%c0, %c0_0] : memref<8x128xf32, #tpu.memory_space<vmem>>, vector<8x128xf32>
    %c0_1 = arith.constant 0 : index
    %c0_2 = arith.constant 0 : index
    %1 = vector.load %arg15[%c0_1, %c0_2] : memref<8x128xf32, #tpu.memory_space<vmem>>, vector<8x128xf32>
    tpu.vector_store %arg15[%c0_1, %c0_2], %0 {strides = array<i32>} : memref<8x128xf32, #tpu.memory_space<vmem>>, vector<8x128xf32>,
    %c0_3 = arith.constant 0 : index
    %c0_4 = arith.constant 0 : index
    %2 = vector.load %arg3[%c0_3, %c0_4] : memref<8x128xf32, #tpu.memory_space<vmem>>, vector<8x128xf32>
    %c0_5 = arith.constant 0 : index
    %c0_6 = arith.constant 0 : index
    %3 = vector.load %arg16[%c0_5, %c0_6] : memref<8x128xf32, #tpu.memory_space<vmem>>, vector<8x128xf32>
    tpu.vector_store %arg16[%c0_5, %c0_6], %2 {strides = array<i32>} : memref<8x128xf32, #tpu.memory_space<vmem>>, vector<8x128xf32>,
    %cst = arith.constant 0.000000e+00 : f32
    %4 = vector.broadcast %cst : f32 to vector<8x128xf32>
    %c0_7 = arith.constant 0 : index
    %c0_8 = arith.constant 0 : index
    %5 = vector.load %arg17[%c0_7, %c0_8] : memref<8x128xf32, #tpu.memory_space<vmem>>, vector<8x128xf32>
    tpu.vector_store %arg17[%c0_7, %c0_8], %4 {strides = array<i32>} : memref<8x128xf32, #tpu.memory_space<vmem>>, vector<8x128xf32>,
    %c0_i32 = arith.constant 0 : i32
    %c5_i32 = arith.constant 5 : i32
    %6 = arith.addi %c0_i32, %c5_i32 : i32
    %c1_i32 = arith.constant 1 : i32
    scf.for %arg19 = %c0_i32 to %6 step %c1_i32  : i32 {
      %c1_i32_10 = arith.constant 1 : i32
      %7 = arith.muli %arg19, %c1_i32_10 : i32
      %c0_i32_11 = arith.constant 0 : i32
      %8 = arith.addi %c0_i32_11, %7 : i32
      %9 = arith.index_cast %8 : i32 to index
      %10 = memref.load %arg0[%9] : memref<5xi32, #tpu.memory_space<smem>>
      %c0_i32_12 = arith.constant 0 : i32
      %11 = arith.cmpi ne, %10, %c0_i32_12 : i32
      %12 = arith.index_cast %8 : i32 to index
      %c0_13 = arith.constant 0 : index
      %c0_14 = arith.constant 0 : index
      %13 = vector.load %arg1[%12, %c0_13, %c0_14] : memref<5x8x128xf32, #tpu.memory_space<vmem>>, vector<1x8x128xf32>
      %14 = vector.shape_cast %13 : vector<1x8x128xf32> to vector<8x128xf32>
      %c0_15 = arith.constant 0 : index
      %c0_16 = arith.constant 0 : index
      %15 = vector.load %arg17[%c0_15, %c0_16] : memref<8x128xf32, #tpu.memory_space<vmem>>, vector<8x128xf32>
      %16 = arith.select %11, %14, %15 : vector<8x128xf32>
      %c0_17 = arith.constant 0 : index
      %c0_18 = arith.constant 0 : index
      %17 = vector.load %arg15[%c0_17, %c0_18] : memref<8x128xf32, #tpu.memory_space<vmem>>, vector<8x128xf32>
      %c0_19 = arith.constant 0 : index
      %c0_20 = arith.constant 0 : index
      %18 = vector.load %arg16[%c0_19, %c0_20] : memref<8x128xf32, #tpu.memory_space<vmem>>, vector<8x128xf32>
      %c0_21 = arith.constant 0 : index
      %c0_22 = arith.constant 0 : index
      %19 = vector.load %arg8[%c0_21, %c0_22] : memref<128x128xf32, #tpu.memory_space<vmem>>, vector<128x128xf32>
      %cst_23 = arith.constant dense<0.000000e+00> : vector<8x128xf32>
      %20 = tpu.matmul %17, %19, %cst_23 {dimension_numbers = #tpu.dot_dimension_numbers<[1], [0], [0], [1], [0, 0, 1, 1], [], []>} : vector<8x128xf32>, vector<128x128xf32>, vector<8x128xf32> -> vector<8x128xf32>
      %21 = vector.shape_cast %20 : vector<8x128xf32> to vector<8x1x128xf32>
      %c0_24 = arith.constant 0 : index
      %c0_25 = arith.constant 0 : index
      %c0_26 = arith.constant 0 : index
      %22 = vector.load %arg5[%c0_24, %c0_25, %c0_26] : memref<8x8x128xf32, #tpu.memory_space<vmem>>, vector<8x8x128xf32>
      %23 = vector.broadcast %21 : vector<8x1x128xf32> to vector<8x8x128xf32>
      %24 = arith.addf %23, %22 : vector<8x8x128xf32>
      %25 = math.tanh %24 : vector<8x8x128xf32>
      %c0_27 = arith.constant 0 : index
      %c0_28 = arith.constant 0 : index
      %26 = vector.load %arg9[%c0_27, %c0_28] : memref<1x128xf32, #tpu.memory_space<vmem>>, vector<1x128xf32>
      %27 = vector.shape_cast %26 : vector<1x128xf32> to vector<1x1x128xf32>
      %28 = vector.broadcast %27 : vector<1x1x128xf32> to vector<8x8x128xf32>
      %29 = arith.mulf %25, %28 : vector<8x8x128xf32>
      %cst_29 = arith.constant dense<0.000000e+00> : vector<8x8xf32>
      %30 = vector.multi_reduction <add>, %29, %cst_29 [2] : vector<8x8x128xf32> to vector<8x8xf32>
      %c0_30 = arith.constant 0 : index
      %c0_31 = arith.constant 0 : index
      %31 = vector.load %arg6[%c0_30, %c0_31] : memref<8x8xf32, #tpu.memory_space<vmem>>, vector<8x8xf32>
      %32 = arith.addf %30, %31 : vector<8x8xf32>
      %cst_32 = arith.constant dense<0xFF800000> : vector<8xf32>
      %33 = vector.multi_reduction <maximumf>, %32, %cst_32 [1] : vector<8x8xf32> to vector<8xf32>
      %34 = vector.shape_cast %33 : vector<8xf32> to vector<8x1xf32>
      %35 = vector.broadcast %34 : vector<8x1xf32> to vector<8x8xf32>
      %36 = arith.subf %32, %35 : vector<8x8xf32>
      %37 = math.exp %36 : vector<8x8xf32>
      %cst_33 = arith.constant dense<0.000000e+00> : vector<8xf32>
      %38 = vector.multi_reduction <add>, %37, %cst_33 [1] : vector<8x8xf32> to vector<8xf32>
      %39 = vector.shape_cast %38 : vector<8xf32> to vector<8x1xf32>
      %40 = vector.broadcast %39 : vector<8x1xf32> to vector<8x8xf32>
      %41 = arith.divf %37, %40 : vector<8x8xf32>
      %42 = vector.shape_cast %41 : vector<8x8xf32> to vector<8x8x1xf32>
      %c0_34 = arith.constant 0 : index
      %c0_35 = arith.constant 0 : index
      %c0_36 = arith.constant 0 : index
      %43 = vector.load %arg4[%c0_34, %c0_35, %c0_36] : memref<8x8x128xf32, #tpu.memory_space<vmem>>, vector<8x8x128xf32>
      %44 = vector.broadcast %42 : vector<8x8x1xf32> to vector<8x8x128xf32>
      %45 = arith.mulf %44, %43 : vector<8x8x128xf32>
      %cst_37 = arith.constant dense<0.000000e+00> : vector<8x128xf32>
      %46 = vector.multi_reduction <add>, %45, %cst_37 [1] : vector<8x8x128xf32> to vector<8x128xf32>
      %c0_38 = arith.constant 0 : index
      %c0_39 = arith.constant 0 : index
      %47 = vector.load %arg18[%c0_38, %c0_39] : memref<8x384xf32, #tpu.memory_space<vmem>>, vector<8x128xf32>
      tpu.vector_store %arg18[%c0_38, %c0_39], %16 {strides = array<i32>} : memref<8x384xf32, #tpu.memory_space<vmem>>, vector<8x128xf32>,
      %c0_40 = arith.constant 0 : index
      %c128 = arith.constant 128 : index
      %48 = vector.load %arg18[%c0_40, %c128] : memref<8x384xf32, #tpu.memory_space<vmem>>, vector<8x128xf32>
      tpu.vector_store %arg18[%c0_40, %c128], %46 {strides = array<i32>} : memref<8x384xf32, #tpu.memory_space<vmem>>, vector<8x128xf32>,
      %c0_41 = arith.constant 0 : index
      %c256 = arith.constant 256 : index
      %49 = vector.load %arg18[%c0_41, %c256] : memref<8x384xf32, #tpu.memory_space<vmem>>, vector<8x128xf32>
      tpu.vector_store %arg18[%c0_41, %c256], %17 {strides = array<i32>} : memref<8x384xf32, #tpu.memory_space<vmem>>, vector<8x128xf32>,
      %c0_42 = arith.constant 0 : index
      %c0_43 = arith.constant 0 : index
      %50 = vector.load %arg18[%c0_42, %c0_43] : memref<8x384xf32, #tpu.memory_space<vmem>>, vector<8x384xf32>
      %c0_44 = arith.constant 0 : index
      %c0_45 = arith.constant 0 : index
      %51 = vector.load %arg10[%c0_44, %c0_45] : memref<384x512xf32, #tpu.memory_space<vmem>>, vector<384x512xf32>
      %cst_46 = arith.constant dense<0.000000e+00> : vector<8x512xf32>
      %52 = tpu.matmul %50, %51, %cst_46 {dimension_numbers = #tpu.dot_dimension_numbers<[1], [0], [0], [1], [0, 0, 1, 1], [], []>} : vector<8x384xf32>, vector<384x512xf32>, vector<8x512xf32> -> vector<8x512xf32>
      %c0_47 = arith.constant 0 : index
      %c0_48 = arith.constant 0 : index
      %53 = vector.load %arg11[%c0_47, %c0_48] : memref<1x512xf32, #tpu.memory_space<vmem>>, vector<1x512xf32>
      %54 = vector.broadcast %53 : vector<1x512xf32> to vector<8x512xf32>
      %55 = arith.addf %52, %54 : vector<8x512xf32>
      %56 = vector.extract_strided_slice %55 {offsets = [0, 0], sizes = [8, 128], strides = [1, 1]} : vector<8x512xf32> to vector<8x128xf32>
      %57 = arith.negf %56 : vector<8x128xf32>
      %58 = math.exp %57 : vector<8x128xf32>
      %cst_49 = arith.constant 1.000000e+00 : f32
      %59 = vector.broadcast %cst_49 : f32 to vector<8x128xf32>
      %60 = arith.addf %59, %58 : vector<8x128xf32>
      %61 = arith.divf %59, %60 : vector<8x128xf32>
      %62 = vector.extract_strided_slice %55 {offsets = [0, 128], sizes = [8, 128], strides = [1, 1]} : vector<8x512xf32> to vector<8x128xf32>
      %63 = arith.negf %62 : vector<8x128xf32>
      %64 = math.exp %63 : vector<8x128xf32>
      %cst_50 = arith.constant 1.000000e+00 : f32
      %65 = vector.broadcast %cst_50 : f32 to vector<8x128xf32>
      %66 = arith.addf %65, %64 : vector<8x128xf32>
      %67 = arith.divf %65, %66 : vector<8x128xf32>
      %68 = vector.extract_strided_slice %55 {offsets = [0, 256], sizes = [8, 128], strides = [1, 1]} : vector<8x512xf32> to vector<8x128xf32>
      %69 = math.tanh %68 : vector<8x128xf32>
      %70 = vector.extract_strided_slice %55 {offsets = [0, 384], sizes = [8, 128], strides = [1, 1]} : vector<8x512xf32> to vector<8x128xf32>
      %71 = arith.negf %70 : vector<8x128xf32>
      %72 = math.exp %71 : vector<8x128xf32>
      %cst_51 = arith.constant 1.000000e+00 : f32
      %73 = vector.broadcast %cst_51 : f32 to vector<8x128xf32>
      %74 = arith.addf %73, %72 : vector<8x128xf32>
      %75 = arith.divf %73, %74 : vector<8x128xf32>
      %76 = arith.mulf %67, %18 : vector<8x128xf32>
      %77 = arith.mulf %61, %69 : vector<8x128xf32>
      %78 = arith.addf %76, %77 : vector<8x128xf32>
      %79 = math.tanh %78 : vector<8x128xf32>
      %80 = arith.mulf %75, %79 : vector<8x128xf32>
      %c0_52 = arith.constant 0 : index
      %c0_53 = arith.constant 0 : index
      %81 = vector.load %arg15[%c0_52, %c0_53] : memref<8x128xf32, #tpu.memory_space<vmem>>, vector<8x128xf32>
      tpu.vector_store %arg15[%c0_52, %c0_53], %80 {strides = array<i32>} : memref<8x128xf32, #tpu.memory_space<vmem>>, vector<8x128xf32>,
      %c0_54 = arith.constant 0 : index
      %c0_55 = arith.constant 0 : index
      %82 = vector.load %arg16[%c0_54, %c0_55] : memref<8x128xf32, #tpu.memory_space<vmem>>, vector<8x128xf32>
      tpu.vector_store %arg16[%c0_54, %c0_55], %78 {strides = array<i32>} : memref<8x128xf32, #tpu.memory_space<vmem>>, vector<8x128xf32>,
      %c0_56 = arith.constant 0 : index
      %c256_57 = arith.constant 256 : index
      %83 = vector.load %arg18[%c0_56, %c256_57] : memref<8x384xf32, #tpu.memory_space<vmem>>, vector<8x128xf32>
      tpu.vector_store %arg18[%c0_56, %c256_57], %80 {strides = array<i32>} : memref<8x384xf32, #tpu.memory_space<vmem>>, vector<8x128xf32>,
      %c0_58 = arith.constant 0 : index
      %c0_59 = arith.constant 0 : index
      %84 = vector.load %arg18[%c0_58, %c0_59] : memref<8x384xf32, #tpu.memory_space<vmem>>, vector<8x384xf32>
      %c0_60 = arith.constant 0 : index
      %c0_61 = arith.constant 0 : index
      %85 = vector.load %arg12[%c0_60, %c0_61] : memref<384x128xf32, #tpu.memory_space<vmem>>, vector<384x128xf32>
      %cst_62 = arith.constant dense<0.000000e+00> : vector<8x128xf32>
      %86 = tpu.matmul %84, %85, %cst_62 {dimension_numbers = #tpu.dot_dimension_numbers<[1], [0], [0], [1], [0, 0, 1, 1], [], []>} : vector<8x384xf32>, vector<384x128xf32>, vector<8x128xf32> -> vector<8x128xf32>
      %c0_63 = arith.constant 0 : index
      %c0_64 = arith.constant 0 : index
      %87 = vector.load %arg13[%c0_63, %c0_64] : memref<1x128xf32, #tpu.memory_space<vmem>>, vector<1x128xf32>
      %88 = vector.broadcast %87 : vector<1x128xf32> to vector<8x128xf32>
      %89 = arith.addf %86, %88 : vector<8x128xf32>
      %90 = arith.index_cast %8 : i32 to index
      %c0_65 = arith.constant 0 : index
      %c0_66 = arith.constant 0 : index
      %91 = vector.load %arg14[%90, %c0_65, %c0_66] : memref<5x8x128xf32, #tpu.memory_space<vmem>>, vector<1x8x128xf32>
      %92 = vector.shape_cast %91 : vector<1x8x128xf32> to vector<8x128xf32>
      %93 = vector.shape_cast %89 : vector<8x128xf32> to vector<1x8x128xf32>
      tpu.vector_store %arg14[%90, %c0_65, %c0_66], %93 {strides = array<i32>} : memref<5x8x128xf32, #tpu.memory_space<vmem>>, vector<1x8x128xf32>,
      %c1_i32_67 = arith.constant 1 : i32
      %94 = arith.addi %8, %c1_i32_67 : i32
      %c4_i32 = arith.constant 4 : i32
      %95 = arith.minsi %94, %c4_i32 : i32
      %c1_i32_68 = arith.constant 1 : i32
      %96 = arith.addi %8, %c1_i32_68 : i32
      %c5_i32_69 = arith.constant 5 : i32
      %97 = arith.cmpi slt, %96, %c5_i32_69 : i32
      %98 = arith.index_cast %95 : i32 to index
      %99 = memref.load %arg0[%98] : memref<5xi32, #tpu.memory_space<smem>>
      %c0_i32_70 = arith.constant 0 : i32
      %100 = arith.cmpi eq, %99, %c0_i32_70 : i32
      %101 = arith.andi %97, %100 : i1
      %102 = arith.extui %101 : i1 to i32
      %c0_i32_71 = arith.constant 0 : i32
      %103 = arith.cmpi ne, %102, %c0_i32_71 : i32
      scf.if %103 {
        %104 = tpu.iota {dimensions = array<i32: 1>} : vector<8x128xi32>
        %c40_i32 = arith.constant 40 : i32
        %105 = vector.broadcast %c40_i32 : i32 to vector<8x128xi32>
        %106 = arith.cmpi slt, %104, %105 : vector<8x128xi32>
        %cst_72 = arith.constant -1.000000e+30 : f32
        %107 = vector.broadcast %cst_72 : f32 to vector<8x128xf32>
        %108 = arith.select %106, %89, %107 : vector<8x128xi1>, vector<8x128xf32>
        %cst_73 = arith.constant dense<0xFF800000> : vector<8xf32>
        %109 = vector.multi_reduction <maximumf>, %108, %cst_73 [1] : vector<8x128xf32> to vector<8xf32>
        %110 = vector.shape_cast %109 : vector<8xf32> to vector<8x1xf32>
        %111 = vector.broadcast %110 : vector<8x1xf32> to vector<8x128xf32>
        %112 = arith.cmpf oeq, %108, %111 : vector<8x128xf32>
        %c128_i32 = arith.constant 128 : i32
        %113 = vector.broadcast %c128_i32 : i32 to vector<8x128xi32>
        %114 = arith.select %112, %104, %113 : vector<8x128xi1>, vector<8x128xi32>
        %cst_74 = arith.constant dense<2147483647> : vector<8xi32>
        %115 = vector.multi_reduction <minsi>, %114, %cst_74 [1] : vector<8x128xi32> to vector<8xi32>
        %116 = vector.shape_cast %115 : vector<8xi32> to vector<8x1xi32>
        %117 = vector.broadcast %116 : vector<8x1xi32> to vector<8x128xi32>
        %118 = arith.cmpi eq, %104, %117 : vector<8x128xi32>
        %119 = arith.extui %118 : vector<8x128xi1> to vector<8x128xi32>
        %120 = arith.sitofp %119 : vector<8x128xi32> to vector<8x128xf32>
        %c0_75 = arith.constant 0 : index
        %c0_76 = arith.constant 0 : index
        %121 = vector.load %arg7[%c0_75, %c0_76] : memref<128x128xf32, #tpu.memory_space<vmem>>, vector<128x128xf32>
        %cst_77 = arith.constant dense<0.000000e+00> : vector<8x128xf32>
        %122 = tpu.matmul %120, %121, %cst_77 {dimension_numbers = #tpu.dot_dimension_numbers<[1], [0], [0], [1], [0, 0, 1, 1], [], []>} : vector<8x128xf32>, vector<128x128xf32>, vector<8x128xf32> -> vector<8x128xf32>
        %c0_78 = arith.constant 0 : index
        %c0_79 = arith.constant 0 : index
        %123 = vector.load %arg17[%c0_78, %c0_79] : memref<8x128xf32, #tpu.memory_space<vmem>>, vector<8x128xf32>
        tpu.vector_store %arg17[%c0_78, %c0_79], %122 {strides = array<i32>} : memref<8x128xf32, #tpu.memory_space<vmem>>, vector<8x128xf32>,
      } else {
      }
    }
    %c5_i32_9 = arith.constant 5 : i32
    return
  }
}

</mosaic_0001>

<llo_original>
// kernel: tpu_custom_call.1
$region0: #{tpu_custom_call.1}
  #allocation0 [shape = 'u32[]', space=smem, size = 0x4, offset = 0x4, fixed_abs, tag = 'smem constant byte address 0x4 - core index']
  #allocation1 [shape = 'u32[144,128]{1,0:T(1,128)}', space=vmem, size = 0x12000, scoped, tag = 'internal scratch']
  #allocation2 [shape = 'f32[8,128]{1,0:T(8,128)}', space=vmem, size = 0x1000, scoped, tag = 'scratch operand']
  #allocation3 [shape = 'f32[8,128]{1,0:T(8,128)}', space=vmem, size = 0x1000, scoped, tag = 'scratch operand']
  #allocation4 [shape = 'f32[8,128]{1,0:T(8,128)}', space=vmem, size = 0x1000, scoped, tag = 'scratch operand']
  #allocation5 [shape = 'f32[8,384]{1,0:T(8,128)}', space=vmem, size = 0x3000, scoped, tag = 'scratch operand']
  %s0 = inlined_call_operand.hbm [shape: s32[5], index: 0, kind: input, shape index: {}]
  %s1 = inlined_call_operand.hbm [shape: f32[5,8,128], index: 1, kind: input, shape index: {}]
  %s2 = inlined_call_operand.hbm [shape: f32[8,128], index: 2, kind: input, shape index: {}]
  %s3 = inlined_call_operand.vmem [shape: f32[8,128], index: 3, kind: input, shape index: {}]
  %s4 = inlined_call_operand.hbm [shape: f32[8,8,128], index: 4, kind: input, shape index: {}]
  %s5 = inlined_call_operand.hbm [shape: f32[8,8,128], index: 5, kind: input, shape index: {}]
  %s6 = inlined_call_operand.vmem [shape: f32[8,8], index: 6, kind: input, shape index: {}]
  %s7 = inlined_call_operand.hbm [shape: f32[128,128], index: 7, kind: input, shape index: {}]
  %s8 = inlined_call_operand.hbm [shape: f32[128,128], index: 8, kind: input, shape index: {}]
  %s9 = inlined_call_operand.vmem [shape: f32[1,128], index: 9, kind: input, shape index: {}]
  %s10 = inlined_call_operand.hbm [shape: f32[384,512], index: 10, kind: input, shape index: {}]
  %s11 = inlined_call_operand.vmem [shape: f32[1,512], index: 11, kind: input, shape index: {}]
  %s12 = inlined_call_operand.hbm [shape: f32[384,128], index: 12, kind: input, shape index: {}]
  %s13 = inlined_call_operand.vmem [shape: f32[1,128], index: 13, kind: input, shape index: {}]
  %s14 = inlined_call_operand.hbm [shape: f32[5,8,128], index: 14, kind: output, shape index: {}]
  %s15 = sld [smem:[#allocation0]]
  $region113: #{tpu_custom_call.1} parent=0
    _
  %s17 = ssub.s32 1, %s15
  %s18 = scalar_select 0, %s17, %s15
  $region1: #{tpu_custom_call.1} parent=0
    #allocation6 [shape = 'u8[512]{0}', space=smem, size = 0x200, scoped, tag = 'input window, operand 0, single buffered']
    #allocation7 [shape = 's32[1]{0}', space=sflag, size = 0x4, scoped, tag = 'scoped memory for tpu_custom_call.1']
    #allocation8 [shape = 's32[1]{0}', space=sflag, size = 0x4, scoped, tag = 'scoped memory for tpu_custom_call.1']
    #allocation9 [shape = 's32[1]{0}', space=sflag, size = 0x4, scoped, tag = 'scoped memory for tpu_custom_call.1']
    #allocation10 [shape = 'u8[20480]{0}', space=vmem, size = 0x5000, scoped, tag = 'input window, operand 1, single buffered']
    #allocation11 [shape = 'u8[4096]{0}', space=vmem, size = 0x1000, scoped, tag = 'input window, operand 2, single buffered']
    #allocation12 [shape = 's32[1]{0}', space=sflag, size = 0x4, scoped, tag = 'scoped memory for tpu_custom_call.1']
    #allocation13 [shape = 'u8[32768]{0}', space=vmem, size = 0x8000, scoped, tag = 'input window, operand 4, single buffered']
    #allocation14 [shape = 'u8[32768]{0}', space=vmem, size = 0x8000, scoped, tag = 'input window, operand 5, single buffered']
    #allocation15 [shape = 's32[1]{0}', space=sflag, size = 0x4, scoped, tag = 'scoped memory for tpu_custom_call.1']
    #allocation16 [shape = 'u8[65536]{0}', space=vmem, size = 0x10000, scoped, tag = 'input window, operand 7, single buffered']
    #allocation17 [shape = 'u8[65536]{0}', space=vmem, size = 0x10000, scoped, tag = 'input window, operand 8, single buffered']
    #allocation18 [shape = 's32[1]{0}', space=sflag, size = 0x4, scoped, tag = 'scoped memory for tpu_custom_call.1']
    #allocation19 [shape = 'u8[786432]{0}', space=vmem, size = 0xc0000, scoped, tag = 'input window, operand 10, single buffered']
    #allocation20 [shape = 'u8[196608]{0}', space=vmem, size = 0x30000, scoped, tag = 'input window, operand 12, single buffered']
    #allocation21 [shape = 's32[1]{0}', space=sflag, size = 0x4, scoped, tag = 'scoped memory for tpu_custom_call.1']
    #allocation22 [shape = 'u8[20480]{0}', space=vmem, size = 0x5000, scoped, tag = 'output window, operand 0, single buffered']
    %19 = vsyncpa [#allocation9], 0
    %20 = vsyncpa [#allocation7], 0
    %21 = vsyncpa [#allocation12], 0
    %22 = vsyncpa [#allocation15], 0
    %23 = vsyncpa [#allocation18], 0
    %24 = vsyncpa [#allocation21], 0
    %25 = vsyncpa [#allocation8], 0
    // Predicated region
    $region2: #{tpu_custom_call.1} parent=1 // pred_check
      _
    $region3: #{tpu_custom_call.1} parent=1 // pred_check_branch
      %27 = sbr.rel (0) target = $region5
    $region4: #{tpu_custom_call.1} parent=1 // pred_region
      %s29 = ssub.s32 16, 16
      %30 = vsyncadd [#allocation9], %s29
      %33 = dma.hbm_to_smem %s0, 16, [#allocation6], [#allocation9]
    $region5: #{tpu_custom_call.1} parent=1 // pred_fallthru
      _
    // Predicated region
    $region6: #{tpu_custom_call.1} parent=1 // pred_check
      _
    $region7: #{tpu_custom_call.1} parent=1 // pred_check_branch
      %35 = sbr.rel (0) target = $region9
    $region8: #{tpu_custom_call.1} parent=1 // pred_region
      %s37 = ssub.s32 640, 640
      %38 = vsyncadd [#allocation7], %s37
      %s39 = sshll.u32 [#allocation10], 4
      %s40 = int_to_ptr.vmem [resolvable:$true] %s39
      %45 = dma.hbm_to_vmem [thread:$0]  %s1, 640, %s40, [#allocation7], 128, 128, 8
    $region9: #{tpu_custom_call.1} parent=1 // pred_fallthru
      _
    // Predicated region
    $region10: #{tpu_custom_call.1} parent=1 // pred_check
      _
    $region11: #{tpu_custom_call.1} parent=1 // pred_check_branch
      %47 = sbr.rel (0) target = $region13
    $region12: #{tpu_custom_call.1} parent=1 // pred_region
      %s49 = ssub.s32 128, 128
      %50 = vsyncadd [#allocation12], %s49
      %s52 = sshll.u32 [#allocation11], 4
      %s53 = int_to_ptr.vmem [resolvable:$true] %s52
      %55 = dma.hbm_to_vmem [thread:$0]  %s2, 128, %s53, [#allocation12]
    $region13: #{tpu_custom_call.1} parent=1 // pred_fallthru
      _
    // Predicated region
    $region14: #{tpu_custom_call.1} parent=1 // pred_check
      _
    $region15: #{tpu_custom_call.1} parent=1 // pred_check_branch
      %57 = sbr.rel (0) target = $region17
    $region16: #{tpu_custom_call.1} parent=1 // pred_region
      _
    $region17: #{tpu_custom_call.1} parent=1 // pred_fallthru
      _
    // Predicated region
    $region18: #{tpu_custom_call.1} parent=1 // pred_check
      _
    $region19: #{tpu_custom_call.1} parent=1 // pred_check_branch
      %59 = sbr.rel (0) target = $region21
    $region20: #{tpu_custom_call.1} parent=1 // pred_region
      %s61 = ssub.s32 1024, 1024
      %62 = vsyncadd [#allocation12], %s61
      %s63 = sshll.u32 [#allocation13], 4
      %s64 = int_to_ptr.vmem [resolvable:$true] %s63
      %69 = dma.hbm_to_vmem [thread:$0]  %s4, 1024, %s64, [#allocation12], 128, 128, 8
    $region21: #{tpu_custom_call.1} parent=1 // pred_fallthru
      _
    // Predicated region
    $region22: #{tpu_custom_call.1} parent=1 // pred_check
      _
    $region23: #{tpu_custom_call.1} parent=1 // pred_check_branch
      %71 = sbr.rel (0) target = $region25
    $region24: #{tpu_custom_call.1} parent=1 // pred_region
      %s73 = ssub.s32 1024, 1024
      %74 = vsyncadd [#allocation15], %s73
      %s75 = sshll.u32 [#allocation14], 4
      %s76 = int_to_ptr.vmem [resolvable:$true] %s75
      %81 = dma.hbm_to_vmem [thread:$0]  %s5, 1024, %s76, [#allocation15], 128, 128, 8
    $region25: #{tpu_custom_call.1} parent=1 // pred_fallthru
      _
    // Predicated region
    $region26: #{tpu_custom_call.1} parent=1 // pred_check
      _
    $region27: #{tpu_custom_call.1} parent=1 // pred_check_branch
      %83 = sbr.rel (0) target = $region29
    $region28: #{tpu_custom_call.1} parent=1 // pred_region
      _
    $region29: #{tpu_custom_call.1} parent=1 // pred_fallthru
      _
    // Predicated region
    $region30: #{tpu_custom_call.1} parent=1 // pred_check
      _
    $region31: #{tpu_custom_call.1} parent=1 // pred_check_branch
      %85 = sbr.rel (0) target = $region33
    $region32: #{tpu_custom_call.1} parent=1 // pred_region
      %s87 = ssub.s32 2048, 2048
      %88 = vsyncadd [#allocation15], %s87
      %s89 = sshll.u32 [#allocation16], 4
      %s90 = int_to_ptr.vmem [resolvable:$true] %s89
      %95 = dma.hbm_to_vmem [thread:$0]  %s7, 2048, %s90, [#allocation15], 128, 128, 8
    $region33: #{tpu_custom_call.1} parent=1 // pred_fallthru
      _
    // Predicated region
    $region34: #{tpu_custom_call.1} parent=1 // pred_check
      _
    $region35: #{tpu_custom_call.1} parent=1 // pred_check_branch
      %97 = sbr.rel (0) target = $region37
    $region36: #{tpu_custom_call.1} parent=1 // pred_region
      %s99 = ssub.s32 2048, 2048
      %100 = vsyncadd [#allocation18], %s99
      %s101 = sshll.u32 [#allocation17], 4
      %s102 = int_to_ptr.vmem [resolvable:$true] %s101
      %107 = dma.hbm_to_vmem [thread:$0]  %s8, 2048, %s102, [#allocation18], 128, 128, 8
    $region37: #{tpu_custom_call.1} parent=1 // pred_fallthru
      _
    // Predicated region
    $region38: #{tpu_custom_call.1} parent=1 // pred_check
      _
    $region39: #{tpu_custom_call.1} parent=1 // pred_check_branch
      %109 = sbr.rel (0) target = $region41
    $region40: #{tpu_custom_call.1} parent=1 // pred_region
      _
    $region41: #{tpu_custom_call.1} parent=1 // pred_fallthru
      _
    // Predicated region
    $region42: #{tpu_custom_call.1} parent=1 // pred_check
      _
    $region43: #{tpu_custom_call.1} parent=1 // pred_check_branch
      %111 = sbr.rel (0) target = $region45
    $region44: #{tpu_custom_call.1} parent=1 // pred_region
      %s113 = ssub.s32 24576, 24576
      %114 = vsyncadd [#allocation18], %s113
      %s115 = sshll.u32 [#allocation19], 4
      %s116 = int_to_ptr.vmem [resolvable:$true] %s115
      %121 = dma.hbm_to_vmem [thread:$0]  %s10, 24576, %s116, [#allocation18], 512, 512, 32
    $region45: #{tpu_custom_call.1} parent=1 // pred_fallthru
      _
    // Predicated region
    $region46: #{tpu_custom_call.1} parent=1 // pred_check
      _
    $region47: #{tpu_custom_call.1} parent=1 // pred_check_branch
      %123 = sbr.rel (0) target = $region49
    $region48: #{tpu_custom_call.1} parent=1 // pred_region
      _
    $region49: #{tpu_custom_call.1} parent=1 // pred_fallthru
      _
    // Predicated region
    $region50: #{tpu_custom_call.1} parent=1 // pred_check
      _
    $region51: #{tpu_custom_call.1} parent=1 // pred_check_branch
      %125 = sbr.rel (0) target = $region53
    $region52: #{tpu_custom_call.1} parent=1 // pred_region
      %s127 = ssub.s32 6144, 6144
      %128 = vsyncadd [#allocation21], %s127
      %s129 = sshll.u32 [#allocation20], 4
      %s130 = int_to_ptr.vmem [resolvable:$true] %s129
      %135 = dma.hbm_to_vmem [thread:$0]  %s12, 6144, %s130, [#allocation21], 128, 128, 8
    $region53: #{tpu_custom_call.1} parent=1 // pred_fallthru
      _
    // Predicated region
    $region54: #{tpu_custom_call.1} parent=1 // pred_check
      _
    $region55: #{tpu_custom_call.1} parent=1 // pred_check_branch
      %137 = sbr.rel (0) target = $region57
    $region56: #{tpu_custom_call.1} parent=1 // pred_region
      _
    $region57: #{tpu_custom_call.1} parent=1 // pred_fallthru
      _
    // Predicated region
    $region58: #{tpu_custom_call.1} parent=1 // pred_check
      _
    $region59: #{tpu_custom_call.1} parent=1 // pred_check_branch
      %139 = sbr.rel (0) target = $region61
    $region60: #{tpu_custom_call.1} parent=1 // pred_region
      %140 = dma.done [#allocation9], 16
    $region61: #{tpu_custom_call.1} parent=1 // pred_fallthru
      _
    // Predicated region
    $region62: #{tpu_custom_call.1} parent=1 // pred_check
      _
    $region63: #{tpu_custom_call.1} parent=1 // pred_check_branch
      %142 = sbr.rel (0) target = $region65
    $region64: #{tpu_custom_call.1} parent=1 // pred_region
      %143 = dma.done [#allocation7], 640
    $region65: #{tpu_custom_call.1} parent=1 // pred_fallthru
      _
    // Predicated region
    $region66: #{tpu_custom_call.1} parent=1 // pred_check
      _
    $region67: #{tpu_custom_call.1} parent=1 // pred_check_branch
      %145 = sbr.rel (0) target = $region69
    $region68: #{tpu_custom_call.1} parent=1 // pred_region
      %146 = dma.done [#allocation12], 128
    $region69: #{tpu_custom_call.1} parent=1 // pred_fallthru
      _
    // Predicated region
    $region70: #{tpu_custom_call.1} parent=1 // pred_check
      _
    $region71: #{tpu_custom_call.1} parent=1 // pred_check_branch
      %148 = sbr.rel (0) target = $region73
    $region72: #{tpu_custom_call.1} parent=1 // pred_region
      %149 = dma.done [#allocation12], 1024
    $region73: #{tpu_custom_call.1} parent=1 // pred_fallthru
      _
    // Predicated region
    $region74: #{tpu_custom_call.1} parent=1 // pred_check
      _
    $region75: #{tpu_custom_call.1} parent=1 // pred_check_branch
      %151 = sbr.rel (0) target = $region77
    $region76: #{tpu_custom_call.1} parent=1 // pred_region
      %152 = dma.done [#allocation15], 1024
    $region77: #{tpu_custom_call.1} parent=1 // pred_fallthru
      _
    // Predicated region
    $region78: #{tpu_custom_call.1} parent=1 // pred_check
      _
    $region79: #{tpu_custom_call.1} parent=1 // pred_check_branch
      %154 = sbr.rel (0) target = $region81
    $region80: #{tpu_custom_call.1} parent=1 // pred_region
      %155 = dma.done [#allocation15], 2048
    $region81: #{tpu_custom_call.1} parent=1 // pred_fallthru
      _
    // Predicated region
    $region82: #{tpu_custom_call.1} parent=1 // pred_check
      _
    $region83: #{tpu_custom_call.1} parent=1 // pred_check_branch
      %157 = sbr.rel (0) target = $region85
    $region84: #{tpu_custom_call.1} parent=1 // pred_region
      %158 = dma.done [#allocation18], 2048
    $region85: #{tpu_custom_call.1} parent=1 // pred_fallthru
      _
    // Predicated region
    $region86: #{tpu_custom_call.1} parent=1 // pred_check
      _
    $region87: #{tpu_custom_call.1} parent=1 // pred_check_branch
      %160 = sbr.rel (0) target = $region89
    $region88: #{tpu_custom_call.1} parent=1 // pred_region
      %161 = dma.done [#allocation18], 24576
    $region89: #{tpu_custom_call.1} parent=1 // pred_fallthru
      _
    // Predicated region
    $region90: #{tpu_custom_call.1} parent=1 // pred_check
      _
    $region91: #{tpu_custom_call.1} parent=1 // pred_check_branch
      %163 = sbr.rel (0) target = $region93
    $region92: #{tpu_custom_call.1} parent=1 // pred_region
      %164 = dma.done [#allocation21], 6144
    $region93: #{tpu_custom_call.1} parent=1 // pred_fallthru
      _
    %165 = sfence
    %v166 = vld [vmem:[#allocation11] sm:$0xff]
    %167 = vst [vmem:[#allocation2] sm:$0xff] %v166
    %v168 = vld [vmem:[%s3] sm:$0xff]
    %169 = vst [vmem:[#allocation3] sm:$0xff] %v168
    %170 = vst [vmem:[#allocation4] sm:$0xff] 0.0
    loop: start=0, step=1, limit=5
    $region94: #{tpu_custom_call.1} parent=1 // loop_pre_header
      _
    $region95: #{tpu_custom_call.1} parent=1 // loop_header
      %s172 = sphi 0, %s176
      %p173 = scmp.ge.s32.totalorder %s172, 5
    $region96: #{tpu_custom_call.1} parent=1 // loop_header_branch
      %175 = sbr.rel (%p173) target = $region100
    $region97: #{tpu_custom_call.1} parent=1 // loop_body
      %s177 = sld [smem:[#allocation6 + %s172]]
      %p178 = scmp.ne.s32.totalorder %s177, 0
      %s179 = smul.u32 %s172, 8
      %s180 = scalar_lea.vmem [#allocation10], %s179
      %v181 = vld [vmem:[%s180] sm:$0xff]
      %v182 = vld [vmem:[#allocation4] sm:$0xff]
      %s183 = scalar_select %p178, 1, 0
      %v184 = vstv %s183
      %vm185 = vcmp.eq.s32.totalorder %v184, 1
      %v186 = vsel %vm185, %v181, %v182
      %v187 = vld [vmem:[#allocation2] sm:$0xff]
      %v188 = vld [vmem:[#allocation3] sm:$0xff]
      %v189 = vld [vmem:[#allocation17] sm:$0xff]
      %v190 = vld [vmem:[#allocation17 + $0x8] sm:$0xff]
      %v191 = vld [vmem:[#allocation17 + $0x10] sm:$0xff]
      %v192 = vld [vmem:[#allocation17 + $0x18] sm:$0xff]
      %v193 = vld [vmem:[#allocation17 + $0x20] sm:$0xff]
      %v194 = vld [vmem:[#allocation17 + $0x28] sm:$0xff]
      %v195 = vld [vmem:[#allocation17 + $0x30] sm:$0xff]
      %v196 = vld [vmem:[#allocation17 + $0x38] sm:$0xff]
      %v197 = vld [vmem:[#allocation17 + $0x40] sm:$0xff]
      %v198 = vld [vmem:[#allocation17 + $0x48] sm:$0xff]
      %v199 = vld [vmem:[#allocation17 + $0x50] sm:$0xff]
      %v200 = vld [vmem:[#allocation17 + $0x58] sm:$0xff]
      %v201 = vld [vmem:[#allocation17 + $0x60] sm:$0xff]
      %v202 = vld [vmem:[#allocation17 + $0x68] sm:$0xff]
      %v203 = vld [vmem:[#allocation17 + $0x70] sm:$0xff]
      %v204 = vld [vmem:[#allocation17 + $0x78] sm:$0xff]
      %205 = vmatprep.subr.mxu0 0.0
      %206 = vmatpush1.msra.mxu0 %v189
      %207 = vmatprep.subr.mxu0 0.0
      %208 = vmatpush1.msra.mxu0 %v190
      %209 = vmatprep.subr.mxu0 0.0
      %210 = vmatpush1.msra.mxu0 %v191
      %211 = vmatprep.subr.mxu0 0.0
      %212 = vmatpush1.msra.mxu0 %v192
      %213 = vmatprep.subr.mxu0 0.0
      %214 = vmatpush1.msra.mxu0 %v193
      %215 = vmatprep.subr.mxu0 0.0
      %216 = vmatpush1.msra.mxu0 %v194
      %217 = vmatprep.subr.mxu0 0.0
      %218 = vmatpush1.msra.mxu0 %v195
      %219 = vmatprep.subr.mxu0 0.0
      %220 = vmatpush1.msra.mxu0 %v196
      %221 = vmatprep.subr.mxu0 0.0
      %222 = vmatpush1.msra.mxu0 %v197
      %223 = vmatprep.subr.mxu0 0.0
      %224 = vmatpush1.msra.mxu0 %v198
      %225 = vmatprep.subr.mxu0 0.0
      %226 = vmatpush1.msra.mxu0 %v199
      %227 = vmatprep.subr.mxu0 0.0
      %228 = vmatpush1.msra.mxu0 %v200
      %229 = vmatprep.subr.mxu0 0.0
      %230 = vmatpush1.msra.mxu0 %v201
      %231 = vmatprep.subr.mxu0 0.0
      %232 = vmatpush1.msra.mxu0 %v202
      %233 = vmatprep.subr.mxu0 0.0
      %234 = vmatpush1.msra.mxu0 %v203
      %235 = vmatprep.subr.mxu0 0.0
      %236 = vmatpush1.msra.mxu0 %v204
      %237 = vmatprep.subr.mxu0 0.0
      %238 = vmatpush1.msra.mxu0 0.0
      %239 = vmatprep.subr.mxu0 0.0
      %240 = vmatpush1.msra.mxu0 0.0
      %241 = vmatprep.subr.mxu0 0.0
      %242 = vmatpush1.msra.mxu0 0.0
      %243 = vmatprep.subr.mxu0 0.0
      %244 = vmatpush1.msra.mxu0 0.0
      %245 = vmatprep.subr.mxu0 0.0
      %246 = vmatpush1.msra.mxu0 0.0
      %247 = vmatprep.subr.mxu0 0.0
      %248 = vmatpush1.msra.mxu0 0.0
      %249 = vmatprep.subr.mxu0 0.0
      %250 = vmatpush1.msra.mxu0 0.0
      %251 = vmatprep.subr.mxu0 0.0
      %252 = vmatpush1.msra.mxu0 0.0
      %253 = vmatprep.subr.mxu0 0.0
      %254 = vmatpush1.msra.mxu0 0.0
      %255 = vmatprep.subr.mxu0 0.0
      %256 = vmatpush1.msra.mxu0 0.0
      %257 = vmatprep.subr.mxu0 0.0
      %258 = vmatpush1.msra.mxu0 0.0
      %259 = vmatprep.subr.mxu0 0.0
      %260 = vmatpush1.msra.mxu0 0.0
      %261 = vmatprep.subr.mxu0 0.0
      %262 = vmatpush1.msra.mxu0 0.0
      %263 = vmatprep.subr.mxu0 0.0
      %264 = vmatpush1.msra.mxu0 0.0
      %265 = vmatprep.subr.mxu0 0.0
      %266 = vmatpush1.msra.mxu0 0.0
      %267 = vmatprep.subr.mxu0 0.0
      %268 = vmatpush1.msra.mxu0 0.0
      %269 = vmatprep.mubr.f32.mxu0 0.0
      %270 = vmatmul.mubr.f32.gmra.mrb[0].mxu0 %v187
      %v271 = vpop.f32.mrb[0].mxu0
      %v272 = vadd.f32 0.0, %v271
      %v273 = vpop.f32.mrb[0].mxu0
      %274 = vdwg.mxu0
      %v276 = vcombine.high %v272, %v272
      %v278 = vunpack.c.l.s4 1966171168
      %v279 = vunpack.c.0.s8 %v278
      %v280 = vlaneseq
      %v281 = vshrl.u32 %v280, 7
      %v282 = vsub.s32 %v279, %v281
      %v283 = vrot.slane %v272, %v282
      %v285 = vunpack.c.l.s4 1966171168
      %v286 = vunpack.c.0.s8 %v285
      %v287 = vlaneseq
      %v288 = vshrl.u32 %v287, 7
      %v289 = vsub.s32 %v286, %v288
      %v290 = vrot.slane %v276, %v289
      %v291 = vcombine.high %v283, %v283
      %v292 = vcombine.high %v290, %v290
      %v294 = vunpack.c.l.s4 1966171168
      %v295 = vunpack.c.0.s8 %v294
      %v296 = vlaneseq
      %v297 = vshrl.u32 %v296, 7
      %v298 = vsub.s32 %v295, %v297
      %v299 = vrot.slane %v283, %v298
      %v301 = vunpack.c.l.s4 1966171168
      %v302 = vunpack.c.0.s8 %v301
      %v303 = vlaneseq
      %v304 = vshrl.u32 %v303, 7
      %v305 = vsub.s32 %v302, %v304
      %v306 = vrot.slane %v290, %v305
      %v308 = vunpack.c.l.s4 1966171168
      %v309 = vunpack.c.0.s8 %v308
      %v310 = vlaneseq
      %v311 = vshrl.u32 %v310, 7
      %v312 = vsub.s32 %v309, %v311
      %v313 = vrot.slane %v291, %v312
      %v315 = vunpack.c.l.s4 1966171168
      %v316 = vunpack.c.0.s8 %v315
      %v317 = vlaneseq
      %v318 = vshrl.u32 %v317, 7
      %v319 = vsub.s32 %v316, %v318
      %v320 = vrot.slane %v292, %v319
      %v321 = vcombine.high %v299, %v299
      %v322 = vcombine.high %v306, %v306
      %v323 = vcombine.high %v313, %v313
      %v324 = vcombine.high %v320, %v320
      %v325 = vld [vmem:[#allocation14] sm:$0xff]
      %v326 = vld [vmem:[#allocation14 + $0x8] sm:$0xff]
      %v327 = vld [vmem:[#allocation14 + $0x10] sm:$0xff]
      %v328 = vld [vmem:[#allocation14 + $0x18] sm:$0xff]
      %v329 = vld [vmem:[#allocation14 + $0x20] sm:$0xff]
      %v330 = vld [vmem:[#allocation14 + $0x28] sm:$0xff]
      %v331 = vld [vmem:[#allocation14 + $0x30] sm:$0xff]
      %v332 = vld [vmem:[#allocation14 + $0x38] sm:$0xff]
      %v333 = vlaneseq
      %v334 = vshrl.u32 %v333, 7
      %v335 = vsub.s32 0, %v334
      %v336 = vrot.slane %v299, %v335
      %v337 = vlaneseq
      %v338 = vshrl.u32 %v337, 7
      %v339 = vsub.s32 0, %v338
      %v340 = vrot.slane %v313, %v339
      %v341 = vlaneseq
      %v342 = vshrl.u32 %v341, 7
      %v343 = vsub.s32 0, %v342
      %v344 = vrot.slane %v321, %v343
      %v345 = vlaneseq
      %v346 = vshrl.u32 %v345, 7
      %v347 = vsub.s32 0, %v346
      %v348 = vrot.slane %v323, %v347
      %v349 = vlaneseq
      %v350 = vshrl.u32 %v349, 7
      %v351 = vsub.s32 0, %v350
      %v352 = vrot.slane %v306, %v351
      %v353 = vlaneseq
      %v354 = vshrl.u32 %v353, 7
      %v355 = vsub.s32 0, %v354
      %v356 = vrot.slane %v320, %v355
      %v357 = vlaneseq
      %v358 = vshrl.u32 %v357, 7
      %v359 = vsub.s32 0, %v358
      %v360 = vrot.slane %v322, %v359
      %v361 = vlaneseq
      %v362 = vshrl.u32 %v361, 7
      %v363 = vsub.s32 0, %v362
      %v364 = vrot.slane %v324, %v363
      %v373 = vadd.f32 %v336, %v325
      %v374 = vadd.f32 %v340, %v326
      %v375 = vadd.f32 %v344, %v327
      %v376 = vadd.f32 %v348, %v328
      %v377 = vadd.f32 %v352, %v329
      %v378 = vadd.f32 %v356, %v330
      %v379 = vadd.f32 %v360, %v331
      %v380 = vadd.f32 %v364, %v332
      %v381 = vtanh.pop %v373
      %v382 = vtanh.pop %v374
      %v383 = vtanh.pop %v375
      %v384 = vtanh.pop %v376
      %v385 = vtanh.pop %v377
      %v386 = vtanh.pop %v378
      %v387 = vtanh.pop %v379
      %v388 = vtanh.pop %v380
      %v389 = vld [vmem:[%s9] sm:$0x1]
      %v391 = vlaneseq
      %v392 = vshrl.u32 %v391, 7
      %v393 = vsub.s32 0, %v392
      %v394 = vrot.slane %v389, %v393
      %v396 = vmul.f32 %v381, %v394
      %v397 = vmul.f32 %v382, %v394
      %v398 = vmul.f32 %v383, %v394
      %v399 = vmul.f32 %v384, %v394
      %v400 = vmul.f32 %v385, %v394
      %v401 = vmul.f32 %v386, %v394
      %v402 = vmul.f32 %v387, %v394
      %v403 = vmul.f32 %v388, %v394
      %404 = vadd.xlane.f32.xlu0 %v396
      %v405 = vpop.xlane.xlu0 %404
      %406 = vadd.xlane.f32.xlu0 %v397
      %v407 = vpop.xlane.xlu0 %406
      %408 = vadd.xlane.f32.xlu0 %v398
      %v409 = vpop.xlane.xlu0 %408
      %410 = vadd.xlane.f32.xlu0 %v399
      %v411 = vpop.xlane.xlu0 %410
      %412 = vadd.xlane.f32.xlu0 %v400
      %v413 = vpop.xlane.xlu0 %412
      %414 = vadd.xlane.f32.xlu0 %v401
      %v415 = vpop.xlane.xlu0 %414
      %416 = vadd.xlane.f32.xlu0 %v402
      %v417 = vpop.xlane.xlu0 %416
      %418 = vadd.xlane.f32.xlu0 %v403
      %v419 = vpop.xlane.xlu0 %418
      %v420 = vld [vmem:[%s6] sm:$0xff]
      %v422 = vlaneseq
      %v423 = vshrl.u32 %v422, 7
      %v424 = vsub.s32 0, %v423
      %v425 = vrot.slane %v420, %v424
      %427 = vbcast.lane.b32.xlu0 %v425, 256
      %v428 = vpop.permute.xlu0 %427
      %v429 = vlaneseq
      %v430 = vshrl.u32 %v429, 7
      %v431 = vsub.s32 1, %v430
      %v432 = vrot.slane %v420, %v431
      %434 = vbcast.lane.b32.xlu0 %v432, 256
      %v435 = vpop.permute.xlu0 %434
      %v436 = vlaneseq
      %v437 = vshrl.u32 %v436, 7
      %v438 = vsub.s32 2, %v437
      %v439 = vrot.slane %v420, %v438
      %441 = vbcast.lane.b32.xlu0 %v439, 256
      %v442 = vpop.permute.xlu0 %441
      %v443 = vlaneseq
      %v444 = vshrl.u32 %v443, 7
      %v445 = vsub.s32 3, %v444
      %v446 = vrot.slane %v420, %v445
      %448 = vbcast.lane.b32.xlu0 %v446, 256
      %v449 = vpop.permute.xlu0 %448
      %v450 = vlaneseq
      %v451 = vshrl.u32 %v450, 7
      %v452 = vsub.s32 4, %v451
      %v453 = vrot.slane %v420, %v452
      %455 = vbcast.lane.b32.xlu0 %v453, 256
      %v456 = vpop.permute.xlu0 %455
      %v457 = vlaneseq
      %v458 = vshrl.u32 %v457, 7
      %v459 = vsub.s32 5, %v458
      %v460 = vrot.slane %v420, %v459
      %462 = vbcast.lane.b32.xlu0 %v460, 256
      %v463 = vpop.permute.xlu0 %462
      %v464 = vlaneseq
      %v465 = vshrl.u32 %v464, 7
      %v466 = vsub.s32 6, %v465
      %v467 = vrot.slane %v420, %v466
      %469 = vbcast.lane.b32.xlu0 %v467, 256
      %v470 = vpop.permute.xlu0 %469
      %v471 = vlaneseq
      %v472 = vshrl.u32 %v471, 7
      %v473 = vsub.s32 7, %v472
      %v474 = vrot.slane %v420, %v473
      %476 = vbcast.lane.b32.xlu0 %v474, 256
      %v477 = vpop.permute.xlu0 %476
      %v486 = vadd.f32 %v405, %v428
      %v487 = vadd.f32 %v407, %v435
      %v488 = vadd.f32 %v409, %v442
      %v489 = vadd.f32 %v411, %v449
      %v490 = vadd.f32 %v413, %v456
      %v491 = vadd.f32 %v415, %v463
      %v492 = vadd.f32 %v417, %v470
      %v493 = vadd.f32 %v419, %v477
      %502 = vset.pattern.permute.xlu0 0
      %503 = vperm.xlu0 %502, %v486
      %v504 = vpop.permute.xlu0 %503
      %505 = vset.pattern.permute.xlu0 0
      %506 = vperm.xlu0 %505, %v487
      %v507 = vpop.permute.xlu0 %506
      %508 = vset.pattern.permute.xlu0 0
      %509 = vperm.xlu0 %508, %v488
      %v510 = vpop.permute.xlu0 %509
      %511 = vset.pattern.permute.xlu0 0
      %512 = vperm.xlu0 %511, %v489
      %v513 = vpop.permute.xlu0 %512
      %514 = vset.pattern.permute.xlu0 0
      %515 = vperm.xlu0 %514, %v490
      %v516 = vpop.permute.xlu0 %515
      %517 = vset.pattern.permute.xlu0 0
      %518 = vperm.xlu0 %517, %v491
      %v519 = vpop.permute.xlu0 %518
      %520 = vset.pattern.permute.xlu0 0
      %521 = vperm.xlu0 %520, %v492
      %v522 = vpop.permute.xlu0 %521
      %523 = vset.pattern.permute.xlu0 0
      %524 = vperm.xlu0 %523, %v493
      %v525 = vpop.permute.xlu0 %524
      %v526 = vlaneseq
      %v527 = vand.u32 %v526, 127
      %v528 = vlaneseq
      %v529 = vshrl.u32 %v528, 7
      %v530 = vsub.s32 %v527, %v529
      %v531 = vrot.slane %v504, %v530
      %v532 = vlaneseq
      %v533 = vshrl.u32 %v532, 7
      %v534 = vsub.s32 %v527, %v533
      %v535 = vrot.slane %v507, %v534
      %v536 = vlaneseq
      %v537 = vshrl.u32 %v536, 7
      %v538 = vsub.s32 %v527, %v537
      %v539 = vrot.slane %v510, %v538
      %v540 = vlaneseq
      %v541 = vshrl.u32 %v540, 7
      %v542 = vsub.s32 %v527, %v541
      %v543 = vrot.slane %v513, %v542
      %v544 = vlaneseq
      %v545 = vshrl.u32 %v544, 7
      %v546 = vsub.s32 %v527, %v545
      %v547 = vrot.slane %v516, %v546
      %v548 = vlaneseq
      %v549 = vshrl.u32 %v548, 7
      %v550 = vsub.s32 %v527, %v549
      %v551 = vrot.slane %v519, %v550
      %v552 = vlaneseq
      %v553 = vshrl.u32 %v552, 7
      %v554 = vsub.s32 %v527, %v553
      %v555 = vrot.slane %v522, %v554
      %v556 = vlaneseq
      %v557 = vshrl.u32 %v556, 7
      %v558 = vsub.s32 %v527, %v557
      %v559 = vrot.slane %v525, %v558
      %vm560 = vcmask 1041409
      %v561 = vsel %vm560, %v535, %v531
      %vm562 = vcmask 1042434
      %v563 = vsel %vm562, %v539, %v561
      %vm564 = vcmask 1043459
      %v565 = vsel %vm564, %v543, %v563
      %vm566 = vcmask 1044484
      %v567 = vsel %vm566, %v547, %v565
      %vm568 = vcmask 1045509
      %v569 = vsel %vm568, %v551, %v567
      %vm570 = vcmask 1046534
      %v571 = vsel %vm570, %v555, %v569
      %vm572 = vcmask 1047559
      %v573 = vsel %vm572, %v559, %v571
      %vm575 = vcmask 64512
      %v576 = vsel %vm575, %v573, -inf
      %577 = vmax.xlane.f32.xlu0 %v576
      %v578 = vpop.xlane.xlu0 %577
      %v580 = vlaneseq
      %v581 = vshrl.u32 %v580, 7
      %v582 = vsub.s32 0, %v581
      %v583 = vrot.slane %v578, %v582
      %v584 = vlaneseq
      %v585 = vshrl.u32 %v584, 7
      %v586 = vsub.s32 1, %v585
      %v587 = vrot.slane %v578, %v586
      %v588 = vlaneseq
      %v589 = vshrl.u32 %v588, 7
      %v590 = vsub.s32 2, %v589
      %v591 = vrot.slane %v578, %v590
      %v592 = vlaneseq
      %v593 = vshrl.u32 %v592, 7
      %v594 = vsub.s32 3, %v593
      %v595 = vrot.slane %v578, %v594
      %v596 = vlaneseq
      %v597 = vshrl.u32 %v596, 7
      %v598 = vsub.s32 4, %v597
      %v599 = vrot.slane %v578, %v598
      %v600 = vlaneseq
      %v601 = vshrl.u32 %v600, 7
      %v602 = vsub.s32 5, %v601
      %v603 = vrot.slane %v578, %v602
      %v604 = vlaneseq
      %v605 = vshrl.u32 %v604, 7
      %v606 = vsub.s32 6, %v605
      %v607 = vrot.slane %v578, %v606
      %v608 = vlaneseq
      %v609 = vshrl.u32 %v608, 7
      %v610 = vsub.s32 7, %v609
      %v611 = vrot.slane %v578, %v610
      %v620 = vsub.f32 %v486, %v583
      %v621 = vsub.f32 %v487, %v587
      %v622 = vsub.f32 %v488, %v591
      %v623 = vsub.f32 %v489, %v595
      %v624 = vsub.f32 %v490, %v599
      %v625 = vsub.f32 %v491, %v603
      %v626 = vsub.f32 %v492, %v607
      %v627 = vsub.f32 %v493, %v611
      %v628 = vmul.f32 %v620, 1.442695
      %v629 = vpow.pop %v628
      %v630 = vmul.f32 %v621, 1.442695
      %v631 = vpow.pop %v630
      %v632 = vmul.f32 %v622, 1.442695
      %v633 = vpow.pop %v632
      %v634 = vmul.f32 %v623, 1.442695
      %v635 = vpow.pop %v634
      %v636 = vmul.f32 %v624, 1.442695
      %v637 = vpow.pop %v636
      %v638 = vmul.f32 %v625, 1.442695
      %v639 = vpow.pop %v638
      %v640 = vmul.f32 %v626, 1.442695
      %v641 = vpow.pop %v640
      %v642 = vmul.f32 %v627, 1.442695
      %v643 = vpow.pop %v642
      %652 = vset.pattern.permute.xlu0 0
      %653 = vperm.xlu0 %652, %v629
      %v654 = vpop.permute.xlu0 %653
      %655 = vset.pattern.permute.xlu0 0
      %656 = vperm.xlu0 %655, %v631
      %v657 = vpop.permute.xlu0 %656
      %658 = vset.pattern.permute.xlu0 0
      %659 = vperm.xlu0 %658, %v633
      %v660 = vpop.permute.xlu0 %659
      %661 = vset.pattern.permute.xlu0 0
      %662 = vperm.xlu0 %661, %v635
      %v663 = vpop.permute.xlu0 %662
      %664 = vset.pattern.permute.xlu0 0
      %665 = vperm.xlu0 %664, %v637
      %v666 = vpop.permute.xlu0 %665
      %667 = vset.pattern.permute.xlu0 0
      %668 = vperm.xlu0 %667, %v639
      %v669 = vpop.permute.xlu0 %668
      %670 = vset.pattern.permute.xlu0 0
      %671 = vperm.xlu0 %670, %v641
      %v672 = vpop.permute.xlu0 %671
      %673 = vset.pattern.permute.xlu0 0
      %674 = vperm.xlu0 %673, %v643
      %v675 = vpop.permute.xlu0 %674
      %v676 = vlaneseq
      %v677 = vshrl.u32 %v676, 7
      %v678 = vsub.s32 %v527, %v677
      %v679 = vrot.slane %v654, %v678
      %v680 = vlaneseq
      %v681 = vshrl.u32 %v680, 7
      %v682 = vsub.s32 %v527, %v681
      %v683 = vrot.slane %v657, %v682
      %v684 = vlaneseq
      %v685 = vshrl.u32 %v684, 7
      %v686 = vsub.s32 %v527, %v685
      %v687 = vrot.slane %v660, %v686
      %v688 = vlaneseq
      %v689 = vshrl.u32 %v688, 7
      %v690 = vsub.s32 %v527, %v689
      %v691 = vrot.slane %v663, %v690
      %v692 = vlaneseq
      %v693 = vshrl.u32 %v692, 7
      %v694 = vsub.s32 %v527, %v693
      %v695 = vrot.slane %v666, %v694
      %v696 = vlaneseq
      %v697 = vshrl.u32 %v696, 7
      %v698 = vsub.s32 %v527, %v697
      %v699 = vrot.slane %v669, %v698
      %v700 = vlaneseq
      %v701 = vshrl.u32 %v700, 7
      %v702 = vsub.s32 %v527, %v701
      %v703 = vrot.slane %v672, %v702
      %v704 = vlaneseq
      %v705 = vshrl.u32 %v704, 7
      %v706 = vsub.s32 %v527, %v705
      %v707 = vrot.slane %v675, %v706
      %v708 = vsel %vm560, %v683, %v679
      %v709 = vsel %vm562, %v687, %v708
      %v710 = vsel %vm564, %v691, %v709
      %v711 = vsel %vm566, %v695, %v710
      %v712 = vsel %vm568, %v699, %v711
      %v713 = vsel %vm570, %v703, %v712
      %v714 = vsel %vm572, %v707, %v713
      %v716 = vsel %vm575, %v714, 0.0
      %717 = vadd.xlane.f32.xlu0 %v716
      %v718 = vpop.xlane.xlu0 %717
      %v720 = vlaneseq
      %v721 = vshrl.u32 %v720, 7
      %v722 = vsub.s32 0, %v721
      %v723 = vrot.slane %v718, %v722
      %v724 = vlaneseq
      %v725 = vshrl.u32 %v724, 7
      %v726 = vsub.s32 1, %v725
      %v727 = vrot.slane %v718, %v726
      %v728 = vlaneseq
      %v729 = vshrl.u32 %v728, 7
      %v730 = vsub.s32 2, %v729
      %v731 = vrot.slane %v718, %v730
      %v732 = vlaneseq
      %v733 = vshrl.u32 %v732, 7
      %v734 = vsub.s32 3, %v733
      %v735 = vrot.slane %v718, %v734
      %v736 = vlaneseq
      %v737 = vshrl.u32 %v736, 7
      %v738 = vsub.s32 4, %v737
      %v739 = vrot.slane %v718, %v738
      %v740 = vlaneseq
      %v741 = vshrl.u32 %v740, 7
      %v742 = vsub.s32 5, %v741
      %v743 = vrot.slane %v718, %v742
      %v744 = vlaneseq
      %v745 = vshrl.u32 %v744, 7
      %v746 = vsub.s32 6, %v745
      %v747 = vrot.slane %v718, %v746
      %v748 = vlaneseq
      %v749 = vshrl.u32 %v748, 7
      %v750 = vsub.s32 7, %v749
      %v751 = vrot.slane %v718, %v750
      %v760 = vrcp.pop %v723
      %v761 = vmul.f32 %v629, %v760
      %v762 = vrcp.pop %v727
      %v763 = vmul.f32 %v631, %v762
      %v764 = vrcp.pop %v731
      %v765 = vmul.f32 %v633, %v764
      %v766 = vrcp.pop %v735
      %v767 = vmul.f32 %v635, %v766
      %v768 = vrcp.pop %v739
      %v769 = vmul.f32 %v637, %v768
      %v770 = vrcp.pop %v743
      %v771 = vmul.f32 %v639, %v770
      %v772 = vrcp.pop %v747
      %v773 = vmul.f32 %v641, %v772
      %v774 = vrcp.pop %v751
      %v775 = vmul.f32 %v643, %v774
      %v776 = vld [vmem:[#allocation13] sm:$0xff]
      %v777 = vld [vmem:[#allocation13 + $0x8] sm:$0xff]
      %v778 = vld [vmem:[#allocation13 + $0x10] sm:$0xff]
      %v779 = vld [vmem:[#allocation13 + $0x18] sm:$0xff]
      %v780 = vld [vmem:[#allocation13 + $0x20] sm:$0xff]
      %v781 = vld [vmem:[#allocation13 + $0x28] sm:$0xff]
      %v782 = vld [vmem:[#allocation13 + $0x30] sm:$0xff]
      %v783 = vld [vmem:[#allocation13 + $0x38] sm:$0xff]
      %785 = vset.pattern.permute.xlu0 0
      %786 = vperm.xlu0 %785, %v761
      %v787 = vpop.permute.xlu0 %786
      %790 = vset.pattern.permute.xlu0 0
      %791 = vperm.xlu0 %790, %v763
      %v792 = vpop.permute.xlu0 %791
      %795 = vset.pattern.permute.xlu0 0
      %796 = vperm.xlu0 %795, %v765
      %v797 = vpop.permute.xlu0 %796
      %800 = vset.pattern.permute.xlu0 0
      %801 = vperm.xlu0 %800, %v767
      %v802 = vpop.permute.xlu0 %801
      %805 = vset.pattern.permute.xlu0 0
      %806 = vperm.xlu0 %805, %v769
      %v807 = vpop.permute.xlu0 %806
      %810 = vset.pattern.permute.xlu0 0
      %811 = vperm.xlu0 %810, %v771
      %v812 = vpop.permute.xlu0 %811
      %815 = vset.pattern.permute.xlu0 0
      %816 = vperm.xlu0 %815, %v773
      %v817 = vpop.permute.xlu0 %816
      %820 = vset.pattern.permute.xlu0 0
      %821 = vperm.xlu0 %820, %v775
      %v822 = vpop.permute.xlu0 %821
      %v824 = vmul.f32 %v787, %v776
      %v825 = vmul.f32 %v792, %v777
      %v826 = vmul.f32 %v797, %v778
      %v827 = vmul.f32 %v802, %v779
      %v828 = vmul.f32 %v807, %v780
      %v829 = vmul.f32 %v812, %v781
      %v830 = vmul.f32 %v817, %v782
      %v831 = vmul.f32 %v822, %v783
      %v832 = vrot.slane %v824, 4
      %v833 = vadd.f32 %v824, %v832
      %v834 = vrot.slane %v833, 2
      %v835 = vadd.f32 %v833, %v834
      %v836 = vrot.slane %v835, 1
      %v837 = vadd.f32 %v835, %v836
      %v838 = vrot.slane %v825, 4
      %v839 = vadd.f32 %v825, %v838
      %v840 = vrot.slane %v839, 2
      %v841 = vadd.f32 %v839, %v840
      %v842 = vrot.slane %v841, 1
      %v843 = vadd.f32 %v841, %v842
      %v844 = vrot.slane %v826, 4
      %v845 = vadd.f32 %v826, %v844
      %v846 = vrot.slane %v845, 2
      %v847 = vadd.f32 %v845, %v846
      %v848 = vrot.slane %v847, 1
      %v849 = vadd.f32 %v847, %v848
      %v850 = vrot.slane %v827, 4
      %v851 = vadd.f32 %v827, %v850
      %v852 = vrot.slane %v851, 2
      %v853 = vadd.f32 %v851, %v852
      %v854 = vrot.slane %v853, 1
      %v855 = vadd.f32 %v853, %v854
      %v856 = vrot.slane %v828, 4
      %v857 = vadd.f32 %v828, %v856
      %v858 = vrot.slane %v857, 2
      %v859 = vadd.f32 %v857, %v858
      %v860 = vrot.slane %v859, 1
      %v861 = vadd.f32 %v859, %v860
      %v862 = vrot.slane %v829, 4
      %v863 = vadd.f32 %v829, %v862
      %v864 = vrot.slane %v863, 2
      %v865 = vadd.f32 %v863, %v864
      %v866 = vrot.slane %v865, 1
      %v867 = vadd.f32 %v865, %v866
      %v868 = vrot.slane %v830, 4
      %v869 = vadd.f32 %v830, %v868
      %v870 = vrot.slane %v869, 2
      %v871 = vadd.f32 %v869, %v870
      %v872 = vrot.slane %v871, 1
      %v873 = vadd.f32 %v871, %v872
      %v874 = vrot.slane %v831, 4
      %v875 = vadd.f32 %v831, %v874
      %v876 = vrot.slane %v875, 2
      %v877 = vadd.f32 %v875, %v876
      %v878 = vrot.slane %v877, 1
      %v879 = vadd.f32 %v877, %v878
      %880 = vst [vmem:[#allocation5] sm:$0xff] %v186
      %v889 = vsel %vm560, %v843, %v837
      %v890 = vsel %vm562, %v849, %v889
      %v891 = vsel %vm564, %v855, %v890
      %v892 = vsel %vm566, %v861, %v891
      %v893 = vsel %vm568, %v867, %v892
      %v894 = vsel %vm570, %v873, %v893
      %v895 = vsel %vm572, %v879, %v894
      %897 = vst [vmem:[#allocation5 + $0x8] sm:$0xff] %v895
      %898 = vst [vmem:[#allocation5 + $0x10] sm:$0xff] %v187
      %v899 = vld [vmem:[#allocation5] sm:$0xff]
      %v900 = vld [vmem:[#allocation5 + $0x8] sm:$0xff]
      %v901 = vld [vmem:[#allocation5 + $0x10] sm:$0xff]
      %v902 = vld [vmem:[#allocation19] sm:$0xff]
      %v903 = vld [vmem:[#allocation19 + $0x8] sm:$0xff]
      %v904 = vld [vmem:[#allocation19 + $0x10] sm:$0xff]
      %v905 = vld [vmem:[#allocation19 + $0x18] sm:$0xff]
      %v906 = vld [vmem:[#allocation19 + $0x20] sm:$0xff]
      %v907 = vld [vmem:[#allocation19 + $0x28] sm:$0xff]
      %v908 = vld [vmem:[#allocation19 + $0x30] sm:$0xff]
      %v909 = vld [vmem:[#allocation19 + $0x38] sm:$0xff]
      %v910 = vld [vmem:[#allocation19 + $0x40] sm:$0xff]
      %v911 = vld [vmem:[#allocation19 + $0x48] sm:$0xff]
      %v912 = vld [vmem:[#allocation19 + $0x50] sm:$0xff]
      %v913 = vld [vmem:[#allocation19 + $0x58] sm:$0xff]
      %v914 = vld [vmem:[#allocation19 + $0x60] sm:$0xff]
      %v915 = vld [vmem:[#allocation19 + $0x68] sm:$0xff]
      %v916 = vld [vmem:[#allocation19 + $0x70] sm:$0xff]
      %v917 = vld [vmem:[#allocation19 + $0x78] sm:$0xff]
      %v918 = vld [vmem:[#allocation19 + $0x80] sm:$0xff]
      %v919 = vld [vmem:[#allocation19 + $0x88] sm:$0xff]
      %v920 = vld [vmem:[#allocation19 + $0x90] sm:$0xff]
      %v921 = vld [vmem:[#allocation19 + $0x98] sm:$0xff]
      %v922 = vld [vmem:[#allocation19 + $0xa0] sm:$0xff]
      %v923 = vld [vmem:[#allocation19 + $0xa8] sm:$0xff]
      %v924 = vld [vmem:[#allocation19 + $0xb0] sm:$0xff]
      %v925 = vld [vmem:[#allocation19 + $0xb8] sm:$0xff]
      %v926 = vld [vmem:[#allocation19 + $0xc0] sm:$0xff]
      %v927 = vld [vmem:[#allocation19 + $0xc8] sm:$0xff]
      %v928 = vld [vmem:[#allocation19 + $0xd0] sm:$0xff]
      %v929 = vld [vmem:[#allocation19 + $0xd8] sm:$0xff]
      %v930 = vld [vmem:[#allocation19 + $0xe0] sm:$0xff]
      %v931 = vld [vmem:[#allocation19 + $0xe8] sm:$0xff]
      %v932 = vld [vmem:[#allocation19 + $0xf0] sm:$0xff]
      %v933 = vld [vmem:[#allocation19 + $0xf8] sm:$0xff]
      %v934 = vld [vmem:[#allocation19 + $0x100] sm:$0xff]
      %v935 = vld [vmem:[#allocation19 + $0x108] sm:$0xff]
      %v936 = vld [vmem:[#allocation19 + $0x110] sm:$0xff]
      %v937 = vld [vmem:[#allocation19 + $0x118] sm:$0xff]
      %v938 = vld [vmem:[#allocation19 + $0x120] sm:$0xff]
      %v939 = vld [vmem:[#allocation19 + $0x128] sm:$0xff]
      %v940 = vld [vmem:[#allocation19 + $0x130] sm:$0xff]
      %v941 = vld [vmem:[#allocation19 + $0x138] sm:$0xff]
      %v942 = vld [vmem:[#allocation19 + $0x140] sm:$0xff]
      %v943 = vld [vmem:[#allocation19 + $0x148] sm:$0xff]
      %v944 = vld [vmem:[#allocation19 + $0x150] sm:$0xff]
      %v945 = vld [vmem:[#allocation19 + $0x158] sm:$0xff]
      %v946 = vld [vmem:[#allocation19 + $0x160] sm:$0xff]
      %v947 = vld [vmem:[#allocation19 + $0x168] sm:$0xff]
      %v948 = vld [vmem:[#allocation19 + $0x170] sm:$0xff]
      %v949 = vld [vmem:[#allocation19 + $0x178] sm:$0xff]
      %v950 = vld [vmem:[#allocation19 + $0x180] sm:$0xff]
      %v951 = vld [vmem:[#allocation19 + $0x188] sm:$0xff]
      %v952 = vld [vmem:[#allocation19 + $0x190] sm:$0xff]
      %v953 = vld [vmem:[#allocation19 + $0x198] sm:$0xff]
      %v954 = vld [vmem:[#allocation19 + $0x1a0] sm:$0xff]
      %v955 = vld [vmem:[#allocation19 + $0x1a8] sm:$0xff]
      %v956 = vld [vmem:[#allocation19 + $0x1b0] sm:$0xff]
      %v957 = vld [vmem:[#allocation19 + $0x1b8] sm:$0xff]
      %v958 = vld [vmem:[#allocation19 + $0x1c0] sm:$0xff]
      %v959 = vld [vmem:[#allocation19 + $0x1c8] sm:$0xff]
      %v960 = vld [vmem:[#allocation19 + $0x1d0] sm:$0xff]
      %v961 = vld [vmem:[#allocation19 + $0x1d8] sm:$0xff]
      %v962 = vld [vmem:[#allocation19 + $0x1e0] sm:$0xff]
      %v963 = vld [vmem:[#allocation19 + $0x1e8] sm:$0xff]
      %v964 = vld [vmem:[#allocation19 + $0x1f0] sm:$0xff]
      %v965 = vld [vmem:[#allocation19 + $0x1f8] sm:$0xff]
      %v966 = vld [vmem:[#allocation19 + $0x200] sm:$0xff]
      %v967 = vld [vmem:[#allocation19 + $0x208] sm:$0xff]
      %v968 = vld [vmem:[#allocation19 + $0x210] sm:$0xff]
      %v969 = vld [vmem:[#allocation19 + $0x218] sm:$0xff]
      %v970 = vld [vmem:[#allocation19 + $0x220] sm:$0xff]
      %v971 = vld [vmem:[#allocation19 + $0x228] sm:$0xff]
      %v972 = vld [vmem:[#allocation19 + $0x230] sm:$0xff]
      %v973 = vld [vmem:[#allocation19 + $0x238] sm:$0xff]
      %v974 = vld [vmem:[#allocation19 + $0x240] sm:$0xff]
      %v975 = vld [vmem:[#allocation19 + $0x248] sm:$0xff]
      %v976 = vld [vmem:[#allocation19 + $0x250] sm:$0xff]
      %v977 = vld [vmem:[#allocation19 + $0x258] sm:$0xff]
      %v978 = vld [vmem:[#allocation19 + $0x260] sm:$0xff]
      %v979 = vld [vmem:[#allocation19 + $0x268] sm:$0xff]
      %v980 = vld [vmem:[#allocation19 + $0x270] sm:$0xff]
      %v981 = vld [vmem:[#allocation19 + $0x278] sm:$0xff]
      %v982 = vld [vmem:[#allocation19 + $0x280] sm:$0xff]
      %v983 = vld [vmem:[#allocation19 + $0x288] sm:$0xff]
      %v984 = vld [vmem:[#allocation19 + $0x290] sm:$0xff]
      %v985 = vld [vmem:[#allocation19 + $0x298] sm:$0xff]
      %v986 = vld [vmem:[#allocation19 + $0x2a0] sm:$0xff]
      %v987 = vld [vmem:[#allocation19 + $0x2a8] sm:$0xff]
      %v988 = vld [vmem:[#allocation19 + $0x2b0] sm:$0xff]
      %v989 = vld [vmem:[#allocation19 + $0x2b8] sm:$0xff]
      %v990 = vld [vmem:[#allocation19 + $0x2c0] sm:$0xff]
      %v991 = vld [vmem:[#allocation19 + $0x2c8] sm:$0xff]
      %v992 = vld [vmem:[#allocation19 + $0x2d0] sm:$0xff]
      %v993 = vld [vmem:[#allocation19 + $0x2d8] sm:$0xff]
      %v994 = vld [vmem:[#allocation19 + $0x2e0] sm:$0xff]
      %v995 = vld [vmem:[#allocation19 + $0x2e8] sm:$0xff]
      %v996 = vld [vmem:[#allocation19 + $0x2f0] sm:$0xff]
      %v997 = vld [vmem:[#allocation19 + $0x2f8] sm:$0xff]
      %v998 = vld [vmem:[#allocation19 + $0x300] sm:$0xff]
      %v999 = vld [vmem:[#allocation19 + $0x308] sm:$0xff]
      %v1000 = vld [vmem:[#allocation19 + $0x310] sm:$0xff]
      %v1001 = vld [vmem:[#allocation19 + $0x318] sm:$0xff]
      %v1002 = vld [vmem:[#allocation19 + $0x320] sm:$0xff]
      %v1003 = vld [vmem:[#allocation19 + $0x328] sm:$0xff]
      %v1004 = vld [vmem:[#allocation19 + $0x330] sm:$0xff]
      %v1005 = vld [vmem:[#allocation19 + $0x338] sm:$0xff]
      %v1006 = vld [vmem:[#allocation19 + $0x340] sm:$0xff]
      %v1007 = vld [vmem:[#allocation19 + $0x348] sm:$0xff]
      %v1008 = vld [vmem:[#allocation19 + $0x350] sm:$0xff]
      %v1009 = vld [vmem:[#allocation19 + $0x358] sm:$0xff]
      %v1010 = vld [vmem:[#allocation19 + $0x360] sm:$0xff]
      %v1011 = vld [vmem:[#allocation19 + $0x368] sm:$0xff]
      %v1012 = vld [vmem:[#allocation19 + $0x370] sm:$0xff]
      %v1013 = vld [vmem:[#allocation19 + $0x378] sm:$0xff]
      %v1014 = vld [vmem:[#allocation19 + $0x380] sm:$0xff]
      %v1015 = vld [vmem:[#allocation19 + $0x388] sm:$0xff]
      %v1016 = vld [vmem:[#allocation19 + $0x390] sm:$0xff]
      %v1017 = vld [vmem:[#allocation19 + $0x398] sm:$0xff]
      %v1018 = vld [vmem:[#allocation19 + $0x3a0] sm:$0xff]
      %v1019 = vld [vmem:[#allocation19 + $0x3a8] sm:$0xff]
      %v1020 = vld [vmem:[#allocation19 + $0x3b0] sm:$0xff]
      %v1021 = vld [vmem:[#allocation19 + $0x3b8] sm:$0xff]
      %v1022 = vld [vmem:[#allocation19 + $0x3c0] sm:$0xff]
      %v1023 = vld [vmem:[#allocation19 + $0x3c8] sm:$0xff]
      %v1024 = vld [vmem:[#allocation19 + $0x3d0] sm:$0xff]
      %v1025 = vld [vmem:[#allocation19 + $0x3d8] sm:$0xff]
      %v1026 = vld [vmem:[#allocation19 + $0x3e0] sm:$0xff]
      %v1027 = vld [vmem:[#allocation19 + $0x3e8] sm:$0xff]
      %v1028 = vld [vmem:[#allocation19 + $0x3f0] sm:$0xff]
      %v1029 = vld [vmem:[#allocation19 + $0x3f8] sm:$0xff]
      %v1030 = vld [vmem:[#allocation19 + $0x400] sm:$0xff]
      %v1031 = vld [vmem:[#allocation19 + $0x408] sm:$0xff]
      %v1032 = vld [vmem:[#allocation19 + $0x410] sm:$0xff]
      %v1033 = vld [vmem:[#allocation19 + $0x418] sm:$0xff]
      %v1034 = vld [vmem:[#allocation19 + $0x420] sm:$0xff]
      %v1035 = vld [vmem:[#allocation19 + $0x428] sm:$0xff]
      %v1036 = vld [vmem:[#allocation19 + $0x430] sm:$0xff]
      %v1037 = vld [vmem:[#allocation19 + $0x438] sm:$0xff]
      %v1038 = vld [vmem:[#allocation19 + $0x440] sm:$0xff]
      %v1039 = vld [vmem:[#allocation19 + $0x448] sm:$0xff]
      %v1040 = vld [vmem:[#allocation19 + $0x450] sm:$0xff]
      %v1041 = vld [vmem:[#allocation19 + $0x458] sm:$0xff]
      %v1042 = vld [vmem:[#allocation19 + $0x460] sm:$0xff]
      %v1043 = vld [vmem:[#allocation19 + $0x468] sm:$0xff]
      %v1044 = vld [vmem:[#allocation19 + $0x470] sm:$0xff]
      %v1045 = vld [vmem:[#allocation19 + $0x478] sm:$0xff]
      %v1046 = vld [vmem:[#allocation19 + $0x480] sm:$0xff]
      %v1047 = vld [vmem:[#allocation19 + $0x488] sm:$0xff]
      %v1048 = vld [vmem:[#allocation19 + $0x490] sm:$0xff]
      %v1049 = vld [vmem:[#allocation19 + $0x498] sm:$0xff]
      %v1050 = vld [vmem:[#allocation19 + $0x4a0] sm:$0xff]
      %v1051 = vld [vmem:[#allocation19 + $0x4a8] sm:$0xff]
      %v1052 = vld [vmem:[#allocation19 + $0x4b0] sm:$0xff]
      %v1053 = vld [vmem:[#allocation19 + $0x4b8] sm:$0xff]
      %v1054 = vld [vmem:[#allocation19 + $0x4c0] sm:$0xff]
      %v1055 = vld [vmem:[#allocation19 + $0x4c8] sm:$0xff]
      %v1056 = vld [vmem:[#allocation19 + $0x4d0] sm:$0xff]
      %v1057 = vld [vmem:[#allocation19 + $0x4d8] sm:$0xff]
      %v1058 = vld [vmem:[#allocation19 + $0x4e0] sm:$0xff]
      %v1059 = vld [vmem:[#allocation19 + $0x4e8] sm:$0xff]
      %v1060 = vld [vmem:[#allocation19 + $0x4f0] sm:$0xff]
      %v1061 = vld [vmem:[#allocation19 + $0x4f8] sm:$0xff]
      %v1062 = vld [vmem:[#allocation19 + $0x500] sm:$0xff]
      %v1063 = vld [vmem:[#allocation19 + $0x508] sm:$0xff]
      %v1064 = vld [vmem:[#allocation19 + $0x510] sm:$0xff]
      %v1065 = vld [vmem:[#allocation19 + $0x518] sm:$0xff]
      %v1066 = vld [vmem:[#allocation19 + $0x520] sm:$0xff]
      %v1067 = vld [vmem:[#allocation19 + $0x528] sm:$0xff]
      %v1068 = vld [vmem:[#allocation19 + $0x530] sm:$0xff]
      %v1069 = vld [vmem:[#allocation19 + $0x538] sm:$0xff]
      %v1070 = vld [vmem:[#allocation19 + $0x540] sm:$0xff]
      %v1071 = vld [vmem:[#allocation19 + $0x548] sm:$0xff]
      %v1072 = vld [vmem:[#allocation19 + $0x550] sm:$0xff]
      %v1073 = vld [vmem:[#allocation19 + $0x558] sm:$0xff]
      %v1074 = vld [vmem:[#allocation19 + $0x560] sm:$0xff]
      %v1075 = vld [vmem:[#allocation19 + $0x568] sm:$0xff]
      %v1076 = vld [vmem:[#allocation19 + $0x570] sm:$0xff]
      %v1077 = vld [vmem:[#allocation19 + $0x578] sm:$0xff]
      %v1078 = vld [vmem:[#allocation19 + $0x580] sm:$0xff]
      %v1079 = vld [vmem:[#allocation19 + $0x588] sm:$0xff]
      %v1080 = vld [vmem:[#allocation19 + $0x590] sm:$0xff]
      %v1081 = vld [vmem:[#allocation19 + $0x598] sm:$0xff]
      %v1082 = vld [vmem:[#allocation19 + $0x5a0] sm:$0xff]
      %v1083 = vld [vmem:[#allocation19 + $0x5a8] sm:$0xff]
      %v1084 = vld [vmem:[#allocation19 + $0x5b0] sm:$0xff]
      %v1085 = vld [vmem:[#allocation19 + $0x5b8] sm:$0xff]
      %v1086 = vld [vmem:[#allocation19 + $0x5c0] sm:$0xff]
      %v1087 = vld [vmem:[#allocation19 + $0x5c8] sm:$0xff]
      %v1088 = vld [vmem:[#allocation19 + $0x5d0] sm:$0xff]
      %v1089 = vld [vmem:[#allocation19 + $0x5d8] sm:$0xff]
      %v1090 = vld [vmem:[#allocation19 + $0x5e0] sm:$0xff]
      %v1091 = vld [vmem:[#allocation19 + $0x5e8] sm:$0xff]
      %v1092 = vld [vmem:[#allocation19 + $0x5f0] sm:$0xff]
      %v1093 = vld [vmem:[#allocation19 + $0x5f8] sm:$0xff]
      %v1094 = vld [vmem:[%s11] sm:$0xf]
      %v1096 = vlaneseq
      %v1097 = vshrl.u32 %v1096, 7
      %v1098 = vsub.s32 0, %v1097
      %v1099 = vrot.slane %v1094, %v1098
      %v1100 = vlaneseq
      %v1101 = vshrl.u32 %v1100, 7
      %v1102 = vsub.s32 1, %v1101
      %v1103 = vrot.slane %v1094, %v1102
      %v1104 = vlaneseq
      %v1105 = vshrl.u32 %v1104, 7
      %v1106 = vsub.s32 2, %v1105
      %v1107 = vrot.slane %v1094, %v1106
      %v1108 = vlaneseq
      %v1109 = vshrl.u32 %v1108, 7
      %v1110 = vsub.s32 3, %v1109
      %v1111 = vrot.slane %v1094, %v1110
      %1116 = vmatprep.subr.mxu0 %v903
      %1117 = vmatpush1.msra.mxu0 %v902
      %1118 = vmatprep.subr.mxu0 %v907
      %1119 = vmatpush1.msra.mxu0 %v906
      %1120 = vmatprep.subr.mxu0 %v911
      %1121 = vmatpush1.msra.mxu0 %v910
      %1122 = vmatprep.subr.mxu0 %v915
      %1123 = vmatpush1.msra.mxu0 %v914
      %1124 = vmatprep.subr.mxu0 %v919
      %1125 = vmatpush1.msra.mxu0 %v918
      %1126 = vmatprep.subr.mxu0 %v923
      %1127 = vmatpush1.msra.mxu0 %v922
      %1128 = vmatprep.subr.mxu0 %v927
      %1129 = vmatpush1.msra.mxu0 %v926
      %1130 = vmatprep.subr.mxu0 %v931
      %1131 = vmatpush1.msra.mxu0 %v930
      %1132 = vmatprep.subr.mxu0 %v935
      %1133 = vmatpush1.msra.mxu0 %v934
      %1134 = vmatprep.subr.mxu0 %v939
      %1135 = vmatpush1.msra.mxu0 %v938
      %1136 = vmatprep.subr.mxu0 %v943
      %1137 = vmatpush1.msra.mxu0 %v942
      %1138 = vmatprep.subr.mxu0 %v947
      %1139 = vmatpush1.msra.mxu0 %v946
      %1140 = vmatprep.subr.mxu0 %v951
      %1141 = vmatpush1.msra.mxu0 %v950
      %1142 = vmatprep.subr.mxu0 %v955
      %1143 = vmatpush1.msra.mxu0 %v954
      %1144 = vmatprep.subr.mxu0 %v959
      %1145 = vmatpush1.msra.mxu0 %v958
      %1146 = vmatprep.subr.mxu0 %v963
      %1147 = vmatpush1.msra.mxu0 %v962
      %1148 = vmatprep.subr.mxu0 %v967
      %1149 = vmatpush1.msra.mxu0 %v966
      %1150 = vmatprep.subr.mxu0 %v971
      %1151 = vmatpush1.msra.mxu0 %v970
      %1152 = vmatprep.subr.mxu0 %v975
      %1153 = vmatpush1.msra.mxu0 %v974
      %1154 = vmatprep.subr.mxu0 %v979
      %1155 = vmatpush1.msra.mxu0 %v978
      %1156 = vmatprep.subr.mxu0 %v983
      %1157 = vmatpush1.msra.mxu0 %v982
      %1158 = vmatprep.subr.mxu0 %v987
      %1159 = vmatpush1.msra.mxu0 %v986
      %1160 = vmatprep.subr.mxu0 %v991
      %1161 = vmatpush1.msra.mxu0 %v990
      %1162 = vmatprep.subr.mxu0 %v995
      %1163 = vmatpush1.msra.mxu0 %v994
      %1164 = vmatprep.subr.mxu0 %v999
      %1165 = vmatpush1.msra.mxu0 %v998
      %1166 = vmatprep.subr.mxu0 %v1003
      %1167 = vmatpush1.msra.mxu0 %v1002
      %1168 = vmatprep.subr.mxu0 %v1007
      %1169 = vmatpush1.msra.mxu0 %v1006
      %1170 = vmatprep.subr.mxu0 %v1011
      %1171 = vmatpush1.msra.mxu0 %v1010
      %1172 = vmatprep.subr.mxu0 %v1015
      %1173 = vmatpush1.msra.mxu0 %v1014
      %1174 = vmatprep.subr.mxu0 %v1019
      %1175 = vmatpush1.msra.mxu0 %v1018
      %1176 = vmatprep.subr.mxu0 %v1023
      %1177 = vmatpush1.msra.mxu0 %v1022
      %1178 = vmatprep.subr.mxu0 %v1027
      %1179 = vmatpush1.msra.mxu0 %v1026
      %1180 = vmatprep.mubr.f32.mxu0 %v900
      %1181 = vmatmul.mubr.f32.gmra.mrb[0].mxu0 %v899
      %v1182 = vpop.f32.mrb[0].mxu0
      %v1183 = vadd.f32 %v1099, %v1182
      %v1184 = vpop.f32.mrb[0].mxu0
      %v1185 = vadd.f32 %v1103, %v1184
      %1186 = vdwg.mxu0
      %1187 = vmatprep.subr.mxu0 %v1031
      %1188 = vmatpush1.msra.mxu0 %v1030
      %1189 = vmatprep.subr.mxu0 %v1035
      %1190 = vmatpush1.msra.mxu0 %v1034
      %1191 = vmatprep.subr.mxu0 %v1039
      %1192 = vmatpush1.msra.mxu0 %v1038
      %1193 = vmatprep.subr.mxu0 %v1043
      %1194 = vmatpush1.msra.mxu0 %v1042
      %1195 = vmatprep.subr.mxu0 %v1047
      %1196 = vmatpush1.msra.mxu0 %v1046
      %1197 = vmatprep.subr.mxu0 %v1051
      %1198 = vmatpush1.msra.mxu0 %v1050
      %1199 = vmatprep.subr.mxu0 %v1055
      %1200 = vmatpush1.msra.mxu0 %v1054
      %1201 = vmatprep.subr.mxu0 %v1059
      %1202 = vmatpush1.msra.mxu0 %v1058
      %1203 = vmatprep.subr.mxu0 %v1063
      %1204 = vmatpush1.msra.mxu0 %v1062
      %1205 = vmatprep.subr.mxu0 %v1067
      %1206 = vmatpush1.msra.mxu0 %v1066
      %1207 = vmatprep.subr.mxu0 %v1071
      %1208 = vmatpush1.msra.mxu0 %v1070
      %1209 = vmatprep.subr.mxu0 %v1075
      %1210 = vmatpush1.msra.mxu0 %v1074
      %1211 = vmatprep.subr.mxu0 %v1079
      %1212 = vmatpush1.msra.mxu0 %v1078
      %1213 = vmatprep.subr.mxu0 %v1083
      %1214 = vmatpush1.msra.mxu0 %v1082
      %1215 = vmatprep.subr.mxu0 %v1087
      %1216 = vmatpush1.msra.mxu0 %v1086
      %1217 = vmatprep.subr.mxu0 %v1091
      %1218 = vmatpush1.msra.mxu0 %v1090
      %1219 = vmatprep.subr.mxu0 0.0
      %1220 = vmatpush1.msra.mxu0 0.0
      %1221 = vmatprep.subr.mxu0 0.0
      %1222 = vmatpush1.msra.mxu0 0.0
      %1223 = vmatprep.subr.mxu0 0.0
      %1224 = vmatpush1.msra.mxu0 0.0
      %1225 = vmatprep.subr.mxu0 0.0
      %1226 = vmatpush1.msra.mxu0 0.0
      %1227 = vmatprep.subr.mxu0 0.0
      %1228 = vmatpush1.msra.mxu0 0.0
      %1229 = vmatprep.subr.mxu0 0.0
      %1230 = vmatpush1.msra.mxu0 0.0
      %1231 = vmatprep.subr.mxu0 0.0
      %1232 = vmatpush1.msra.mxu0 0.0
      %1233 = vmatprep.subr.mxu0 0.0
      %1234 = vmatpush1.msra.mxu0 0.0
      %1235 = vmatprep.subr.mxu0 0.0
      %1236 = vmatpush1.msra.mxu0 0.0
      %1237 = vmatprep.subr.mxu0 0.0
      %1238 = vmatpush1.msra.mxu0 0.0
      %1239 = vmatprep.subr.mxu0 0.0
      %1240 = vmatpush1.msra.mxu0 0.0
      %1241 = vmatprep.subr.mxu0 0.0
      %1242 = vmatpush1.msra.mxu0 0.0
      %1243 = vmatprep.subr.mxu0 0.0
      %1244 = vmatpush1.msra.mxu0 0.0
      %1245 = vmatprep.subr.mxu0 0.0
      %1246 = vmatpush1.msra.mxu0 0.0
      %1247 = vmatprep.subr.mxu0 0.0
      %1248 = vmatpush1.msra.mxu0 0.0
      %1249 = vmatprep.subr.mxu0 0.0
      %1250 = vmatpush1.msra.mxu0 0.0
      %1251 = vmatprep.mubr.f32.mxu0 0.0
      %1252 = vmatmul.mubr.f32.gmra.mrb[0].mxu0 %v901
      %v1253 = vpop.f32.mrb[0].mxu0
      %v1254 = vadd.f32 %v1183, %v1253
      %v1255 = vpop.f32.mrb[0].mxu0
      %v1256 = vadd.f32 %v1185, %v1255
      %1257 = vdwg.mxu0
      %1258 = vmatprep.subr.mxu0 %v905
      %1259 = vmatpush1.msra.mxu0 %v904
      %1260 = vmatprep.subr.mxu0 %v909
      %1261 = vmatpush1.msra.mxu0 %v908
      %1262 = vmatprep.subr.mxu0 %v913
      %1263 = vmatpush1.msra.mxu0 %v912
      %1264 = vmatprep.subr.mxu0 %v917
      %1265 = vmatpush1.msra.mxu0 %v916
      %1266 = vmatprep.subr.mxu0 %v921
      %1267 = vmatpush1.msra.mxu0 %v920
      %1268 = vmatprep.subr.mxu0 %v925
      %1269 = vmatpush1.msra.mxu0 %v924
      %1270 = vmatprep.subr.mxu0 %v929
      %1271 = vmatpush1.msra.mxu0 %v928
      %1272 = vmatprep.subr.mxu0 %v933
      %1273 = vmatpush1.msra.mxu0 %v932
      %1274 = vmatprep.subr.mxu0 %v937
      %1275 = vmatpush1.msra.mxu0 %v936
      %1276 = vmatprep.subr.mxu0 %v941
      %1277 = vmatpush1.msra.mxu0 %v940
      %1278 = vmatprep.subr.mxu0 %v945
      %1279 = vmatpush1.msra.mxu0 %v944
      %1280 = vmatprep.subr.mxu0 %v949
      %1281 = vmatpush1.msra.mxu0 %v948
      %1282 = vmatprep.subr.mxu0 %v953
      %1283 = vmatpush1.msra.mxu0 %v952
      %1284 = vmatprep.subr.mxu0 %v957
      %1285 = vmatpush1.msra.mxu0 %v956
      %1286 = vmatprep.subr.mxu0 %v961
      %1287 = vmatpush1.msra.mxu0 %v960
      %1288 = vmatprep.subr.mxu0 %v965
      %1289 = vmatpush1.msra.mxu0 %v964
      %1290 = vmatprep.subr.mxu0 %v969
      %1291 = vmatpush1.msra.mxu0 %v968
      %1292 = vmatprep.subr.mxu0 %v973
      %1293 = vmatpush1.msra.mxu0 %v972
      %1294 = vmatprep.subr.mxu0 %v977
      %1295 = vmatpush1.msra.mxu0 %v976
      %1296 = vmatprep.subr.mxu0 %v981
      %1297 = vmatpush1.msra.mxu0 %v980
      %1298 = vmatprep.subr.mxu0 %v985
      %1299 = vmatpush1.msra.mxu0 %v984
      %1300 = vmatprep.subr.mxu0 %v989
      %1301 = vmatpush1.msra.mxu0 %v988
      %1302 = vmatprep.subr.mxu0 %v993
      %1303 = vmatpush1.msra.mxu0 %v992
      %1304 = vmatprep.subr.mxu0 %v997
      %1305 = vmatpush1.msra.mxu0 %v996
      %1306 = vmatprep.subr.mxu0 %v1001
      %1307 = vmatpush1.msra.mxu0 %v1000
      %1308 = vmatprep.subr.mxu0 %v1005
      %1309 = vmatpush1.msra.mxu0 %v1004
      %1310 = vmatprep.subr.mxu0 %v1009
      %1311 = vmatpush1.msra.mxu0 %v1008
      %1312 = vmatprep.subr.mxu0 %v1013
      %1313 = vmatpush1.msra.mxu0 %v1012
      %1314 = vmatprep.subr.mxu0 %v1017
      %1315 = vmatpush1.msra.mxu0 %v1016
      %1316 = vmatprep.subr.mxu0 %v1021
      %1317 = vmatpush1.msra.mxu0 %v1020
      %1318 = vmatprep.subr.mxu0 %v1025
      %1319 = vmatpush1.msra.mxu0 %v1024
      %1320 = vmatprep.subr.mxu0 %v1029
      %1321 = vmatpush1.msra.mxu0 %v1028
      %1322 = vmatprep.mubr.f32.mxu0 %v900
      %1323 = vmatmul.mubr.f32.gmra.mrb[0].mxu0 %v899
      %v1324 = vpop.f32.mrb[0].mxu0
      %v1325 = vadd.f32 %v1107, %v1324
      %v1326 = vpop.f32.mrb[0].mxu0
      %v1327 = vadd.f32 %v1111, %v1326
      %1328 = vdwg.mxu0
      %1329 = vmatprep.subr.mxu0 %v1033
      %1330 = vmatpush1.msra.mxu0 %v1032
      %1331 = vmatprep.subr.mxu0 %v1037
      %1332 = vmatpush1.msra.mxu0 %v1036
      %1333 = vmatprep.subr.mxu0 %v1041
      %1334 = vmatpush1.msra.mxu0 %v1040
      %1335 = vmatprep.subr.mxu0 %v1045
      %1336 = vmatpush1.msra.mxu0 %v1044
      %1337 = vmatprep.subr.mxu0 %v1049
      %1338 = vmatpush1.msra.mxu0 %v1048
      %1339 = vmatprep.subr.mxu0 %v1053
      %1340 = vmatpush1.msra.mxu0 %v1052
      %1341 = vmatprep.subr.mxu0 %v1057
      %1342 = vmatpush1.msra.mxu0 %v1056
      %1343 = vmatprep.subr.mxu0 %v1061
      %1344 = vmatpush1.msra.mxu0 %v1060
      %1345 = vmatprep.subr.mxu0 %v1065
      %1346 = vmatpush1.msra.mxu0 %v1064
      %1347 = vmatprep.subr.mxu0 %v1069
      %1348 = vmatpush1.msra.mxu0 %v1068
      %1349 = vmatprep.subr.mxu0 %v1073
      %1350 = vmatpush1.msra.mxu0 %v1072
      %1351 = vmatprep.subr.mxu0 %v1077
      %1352 = vmatpush1.msra.mxu0 %v1076
      %1353 = vmatprep.subr.mxu0 %v1081
      %1354 = vmatpush1.msra.mxu0 %v1080
      %1355 = vmatprep.subr.mxu0 %v1085
      %1356 = vmatpush1.msra.mxu0 %v1084
      %1357 = vmatprep.subr.mxu0 %v1089
      %1358 = vmatpush1.msra.mxu0 %v1088
      %1359 = vmatprep.subr.mxu0 %v1093
      %1360 = vmatpush1.msra.mxu0 %v1092
      %1361 = vmatprep.subr.mxu0 0.0
      %1362 = vmatpush1.msra.mxu0 0.0
      %1363 = vmatprep.subr.mxu0 0.0
      %1364 = vmatpush1.msra.mxu0 0.0
      %1365 = vmatprep.subr.mxu0 0.0
      %1366 = vmatpush1.msra.mxu0 0.0
      %1367 = vmatprep.subr.mxu0 0.0
      %1368 = vmatpush1.msra.mxu0 0.0
      %1369 = vmatprep.subr.mxu0 0.0
      %1370 = vmatpush1.msra.mxu0 0.0
      %1371 = vmatprep.subr.mxu0 0.0
      %1372 = vmatpush1.msra.mxu0 0.0
      %1373 = vmatprep.subr.mxu0 0.0
      %1374 = vmatpush1.msra.mxu0 0.0
      %1375 = vmatprep.subr.mxu0 0.0
      %1376 = vmatpush1.msra.mxu0 0.0
      %1377 = vmatprep.subr.mxu0 0.0
      %1378 = vmatpush1.msra.mxu0 0.0
      %1379 = vmatprep.subr.mxu0 0.0
      %1380 = vmatpush1.msra.mxu0 0.0
      %1381 = vmatprep.subr.mxu0 0.0
      %1382 = vmatpush1.msra.mxu0 0.0
      %1383 = vmatprep.subr.mxu0 0.0
      %1384 = vmatpush1.msra.mxu0 0.0
      %1385 = vmatprep.subr.mxu0 0.0
      %1386 = vmatpush1.msra.mxu0 0.0
      %1387 = vmatprep.subr.mxu0 0.0
      %1388 = vmatpush1.msra.mxu0 0.0
      %1389 = vmatprep.subr.mxu0 0.0
      %1390 = vmatpush1.msra.mxu0 0.0
      %1391 = vmatprep.subr.mxu0 0.0
      %1392 = vmatpush1.msra.mxu0 0.0
      %1393 = vmatprep.mubr.f32.mxu0 0.0
      %1394 = vmatmul.mubr.f32.gmra.mrb[0].mxu0 %v901
      %v1395 = vpop.f32.mrb[0].mxu0
      %v1396 = vadd.f32 %v1325, %v1395
      %v1397 = vpop.f32.mrb[0].mxu0
      %v1398 = vadd.f32 %v1327, %v1397
      %1399 = vdwg.mxu0
      %v1400 = vxor.u32 %v1254, 2147483648
      %v1401 = vmul.f32 %v1400, 1.442695
      %v1402 = vpow.pop %v1401
      %v1403 = vadd.f32 %v1402, 1.0
      %v1404 = vrcp.pop %v1403
      %v1405 = vmul.f32 1.0, %v1404
      %v1406 = vxor.u32 %v1256, 2147483648
      %v1407 = vmul.f32 %v1406, 1.442695
      %v1408 = vpow.pop %v1407
      %v1409 = vadd.f32 %v1408, 1.0
      %v1410 = vrcp.pop %v1409
      %v1411 = vmul.f32 1.0, %v1410
      %v1412 = vtanh.pop %v1396
      %v1413 = vxor.u32 %v1398, 2147483648
      %v1414 = vmul.f32 %v1413, 1.442695
      %v1415 = vpow.pop %v1414
      %v1416 = vadd.f32 %v1415, 1.0
      %v1417 = vrcp.pop %v1416
      %v1418 = vmul.f32 1.0, %v1417
      %v1419 = vmul.f32 %v1411, %v188
      %v1420 = vmul.f32 %v1405, %v1412
      %v1421 = vadd.f32 %v1419, %v1420
      %v1422 = vtanh.pop %v1421
      %v1423 = vmul.f32 %v1418, %v1422
      %1424 = vst [vmem:[#allocation2] sm:$0xff] %v1423
      %1425 = vst [vmem:[#allocation3] sm:$0xff] %v1421
      %1426 = vst [vmem:[#allocation5 + $0x10] sm:$0xff] %v1423
      %v1427 = vld [vmem:[#allocation5] sm:$0xff]
      %v1428 = vld [vmem:[#allocation5 + $0x8] sm:$0xff]
      %v1429 = vld [vmem:[#allocation5 + $0x10] sm:$0xff]
      %v1430 = vld [vmem:[#allocation20] sm:$0xff]
      %v1431 = vld [vmem:[#allocation20 + $0x8] sm:$0xff]
      %v1432 = vld [vmem:[#allocation20 + $0x10] sm:$0xff]
      %v1433 = vld [vmem:[#allocation20 + $0x18] sm:$0xff]
      %v1434 = vld [vmem:[#allocation20 + $0x20] sm:$0xff]
      %v1435 = vld [vmem:[#allocation20 + $0x28] sm:$0xff]
      %v1436 = vld [vmem:[#allocation20 + $0x30] sm:$0xff]
      %v1437 = vld [vmem:[#allocation20 + $0x38] sm:$0xff]
      %v1438 = vld [vmem:[#allocation20 + $0x40] sm:$0xff]
      %v1439 = vld [vmem:[#allocation20 + $0x48] sm:$0xff]
      %v1440 = vld [vmem:[#allocation20 + $0x50] sm:$0xff]
      %v1441 = vld [vmem:[#allocation20 + $0x58] sm:$0xff]
      %v1442 = vld [vmem:[#allocation20 + $0x60] sm:$0xff]
      %v1443 = vld [vmem:[#allocation20 + $0x68] sm:$0xff]
      %v1444 = vld [vmem:[#allocation20 + $0x70] sm:$0xff]
      %v1445 = vld [vmem:[#allocation20 + $0x78] sm:$0xff]
      %v1446 = vld [vmem:[#allocation20 + $0x80] sm:$0xff]
      %v1447 = vld [vmem:[#allocation20 + $0x88] sm:$0xff]
      %v1448 = vld [vmem:[#allocation20 + $0x90] sm:$0xff]
      %v1449 = vld [vmem:[#allocation20 + $0x98] sm:$0xff]
      %v1450 = vld [vmem:[#allocation20 + $0xa0] sm:$0xff]
      %v1451 = vld [vmem:[#allocation20 + $0xa8] sm:$0xff]
      %v1452 = vld [vmem:[#allocation20 + $0xb0] sm:$0xff]
      %v1453 = vld [vmem:[#allocation20 + $0xb8] sm:$0xff]
      %v1454 = vld [vmem:[#allocation20 + $0xc0] sm:$0xff]
      %v1455 = vld [vmem:[#allocation20 + $0xc8] sm:$0xff]
      %v1456 = vld [vmem:[#allocation20 + $0xd0] sm:$0xff]
      %v1457 = vld [vmem:[#allocation20 + $0xd8] sm:$0xff]
      %v1458 = vld [vmem:[#allocation20 + $0xe0] sm:$0xff]
      %v1459 = vld [vmem:[#allocation20 + $0xe8] sm:$0xff]
      %v1460 = vld [vmem:[#allocation20 + $0xf0] sm:$0xff]
      %v1461 = vld [vmem:[#allocation20 + $0xf8] sm:$0xff]
      %v1462 = vld [vmem:[#allocation20 + $0x100] sm:$0xff]
      %v1463 = vld [vmem:[#allocation20 + $0x108] sm:$0xff]
      %v1464 = vld [vmem:[#allocation20 + $0x110] sm:$0xff]
      %v1465 = vld [vmem:[#allocation20 + $0x118] sm:$0xff]
      %v1466 = vld [vmem:[#allocation20 + $0x120] sm:$0xff]
      %v1467 = vld [vmem:[#allocation20 + $0x128] sm:$0xff]
      %v1468 = vld [vmem:[#allocation20 + $0x130] sm:$0xff]
      %v1469 = vld [vmem:[#allocation20 + $0x138] sm:$0xff]
      %v1470 = vld [vmem:[#allocation20 + $0x140] sm:$0xff]
      %v1471 = vld [vmem:[#allocation20 + $0x148] sm:$0xff]
      %v1472 = vld [vmem:[#allocation20 + $0x150] sm:$0xff]
      %v1473 = vld [vmem:[#allocation20 + $0x158] sm:$0xff]
      %v1474 = vld [vmem:[#allocation20 + $0x160] sm:$0xff]
      %v1475 = vld [vmem:[#allocation20 + $0x168] sm:$0xff]
      %v1476 = vld [vmem:[#allocation20 + $0x170] sm:$0xff]
      %v1477 = vld [vmem:[#allocation20 + $0x178] sm:$0xff]
      %v1478 = vld [vmem:[%s13] sm:$0x1]
      %v1480 = vlaneseq
      %v1481 = vshrl.u32 %v1480, 7
      %v1482 = vsub.s32 0, %v1481
      %v1483 = vrot.slane %v1478, %v1482
      %1485 = vmatprep.subr.mxu0 0.0
      %1486 = vmatpush1.msra.mxu0 %v1430
      %1487 = vmatprep.subr.mxu0 0.0
      %1488 = vmatpush1.msra.mxu0 %v1431
      %1489 = vmatprep.subr.mxu0 0.0
      %1490 = vmatpush1.msra.mxu0 %v1432
      %1491 = vmatprep.subr.mxu0 0.0
      %1492 = vmatpush1.msra.mxu0 %v1433
      %1493 = vmatprep.subr.mxu0 0.0
      %1494 = vmatpush1.msra.mxu0 %v1434
      %1495 = vmatprep.subr.mxu0 0.0
      %1496 = vmatpush1.msra.mxu0 %v1435
      %1497 = vmatprep.subr.mxu0 0.0
      %1498 = vmatpush1.msra.mxu0 %v1436
      %1499 = vmatprep.subr.mxu0 0.0
      %1500 = vmatpush1.msra.mxu0 %v1437
      %1501 = vmatprep.subr.mxu0 0.0
      %1502 = vmatpush1.msra.mxu0 %v1438
      %1503 = vmatprep.subr.mxu0 0.0
      %1504 = vmatpush1.msra.mxu0 %v1439
      %1505 = vmatprep.subr.mxu0 0.0
      %1506 = vmatpush1.msra.mxu0 %v1440
      %1507 = vmatprep.subr.mxu0 0.0
      %1508 = vmatpush1.msra.mxu0 %v1441
      %1509 = vmatprep.subr.mxu0 0.0
      %1510 = vmatpush1.msra.mxu0 %v1442
      %1511 = vmatprep.subr.mxu0 0.0
      %1512 = vmatpush1.msra.mxu0 %v1443
      %1513 = vmatprep.subr.mxu0 0.0
      %1514 = vmatpush1.msra.mxu0 %v1444
      %1515 = vmatprep.subr.mxu0 0.0
      %1516 = vmatpush1.msra.mxu0 %v1445
      %1517 = vmatprep.subr.mxu0 0.0
      %1518 = vmatpush1.msra.mxu0 %v1446
      %1519 = vmatprep.subr.mxu0 0.0
      %1520 = vmatpush1.msra.mxu0 %v1447
      %1521 = vmatprep.subr.mxu0 0.0
      %1522 = vmatpush1.msra.mxu0 %v1448
      %1523 = vmatprep.subr.mxu0 0.0
      %1524 = vmatpush1.msra.mxu0 %v1449
      %1525 = vmatprep.subr.mxu0 0.0
      %1526 = vmatpush1.msra.mxu0 %v1450
      %1527 = vmatprep.subr.mxu0 0.0
      %1528 = vmatpush1.msra.mxu0 %v1451
      %1529 = vmatprep.subr.mxu0 0.0
      %1530 = vmatpush1.msra.mxu0 %v1452
      %1531 = vmatprep.subr.mxu0 0.0
      %1532 = vmatpush1.msra.mxu0 %v1453
      %1533 = vmatprep.subr.mxu0 0.0
      %1534 = vmatpush1.msra.mxu0 %v1454
      %1535 = vmatprep.subr.mxu0 0.0
      %1536 = vmatpush1.msra.mxu0 %v1455
      %1537 = vmatprep.subr.mxu0 0.0
      %1538 = vmatpush1.msra.mxu0 %v1456
      %1539 = vmatprep.subr.mxu0 0.0
      %1540 = vmatpush1.msra.mxu0 %v1457
      %1541 = vmatprep.subr.mxu0 0.0
      %1542 = vmatpush1.msra.mxu0 %v1458
      %1543 = vmatprep.subr.mxu0 0.0
      %1544 = vmatpush1.msra.mxu0 %v1459
      %1545 = vmatprep.subr.mxu0 0.0
      %1546 = vmatpush1.msra.mxu0 %v1460
      %1547 = vmatprep.subr.mxu0 0.0
      %1548 = vmatpush1.msra.mxu0 %v1461
      %1549 = vmatprep.mubr.f32.mxu0 %v1428
      %1550 = vmatmul.mubr.f32.gmra.mrb[0].mxu0 %v1427
      %v1551 = vpop.f32.mrb[0].mxu0
      %v1552 = vadd.f32 %v1483, %v1551
      %v1553 = vpop.f32.mrb[0].mxu0
      %1554 = vdwg.mxu0
      %1555 = vmatprep.subr.mxu0 0.0
      %1556 = vmatpush1.msra.mxu0 %v1462
      %1557 = vmatprep.subr.mxu0 0.0
      %1558 = vmatpush1.msra.mxu0 %v1463
      %1559 = vmatprep.subr.mxu0 0.0
      %1560 = vmatpush1.msra.mxu0 %v1464
      %1561 = vmatprep.subr.mxu0 0.0
      %1562 = vmatpush1.msra.mxu0 %v1465
      %1563 = vmatprep.subr.mxu0 0.0
      %1564 = vmatpush1.msra.mxu0 %v1466
      %1565 = vmatprep.subr.mxu0 0.0
      %1566 = vmatpush1.msra.mxu0 %v1467
      %1567 = vmatprep.subr.mxu0 0.0
      %1568 = vmatpush1.msra.mxu0 %v1468
      %1569 = vmatprep.subr.mxu0 0.0
      %1570 = vmatpush1.msra.mxu0 %v1469
      %1571 = vmatprep.subr.mxu0 0.0
      %1572 = vmatpush1.msra.mxu0 %v1470
      %1573 = vmatprep.subr.mxu0 0.0
      %1574 = vmatpush1.msra.mxu0 %v1471
      %1575 = vmatprep.subr.mxu0 0.0
      %1576 = vmatpush1.msra.mxu0 %v1472
      %1577 = vmatprep.subr.mxu0 0.0
      %1578 = vmatpush1.msra.mxu0 %v1473
      %1579 = vmatprep.subr.mxu0 0.0
      %1580 = vmatpush1.msra.mxu0 %v1474
      %1581 = vmatprep.subr.mxu0 0.0
      %1582 = vmatpush1.msra.mxu0 %v1475
      %1583 = vmatprep.subr.mxu0 0.0
      %1584 = vmatpush1.msra.mxu0 %v1476
      %1585 = vmatprep.subr.mxu0 0.0
      %1586 = vmatpush1.msra.mxu0 %v1477
      %1587 = vmatprep.subr.mxu0 0.0
      %1588 = vmatpush1.msra.mxu0 0.0
      %1589 = vmatprep.subr.mxu0 0.0
      %1590 = vmatpush1.msra.mxu0 0.0
      %1591 = vmatprep.subr.mxu0 0.0
      %1592 = vmatpush1.msra.mxu0 0.0
      %1593 = vmatprep.subr.mxu0 0.0
      %1594 = vmatpush1.msra.mxu0 0.0
      %1595 = vmatprep.subr.mxu0 0.0
      %1596 = vmatpush1.msra.mxu0 0.0
      %1597 = vmatprep.subr.mxu0 0.0
      %1598 = vmatpush1.msra.mxu0 0.0
      %1599 = vmatprep.subr.mxu0 0.0
      %1600 = vmatpush1.msra.mxu0 0.0
      %1601 = vmatprep.subr.mxu0 0.0
      %1602 = vmatpush1.msra.mxu0 0.0
      %1603 = vmatprep.subr.mxu0 0.0
      %1604 = vmatpush1.msra.mxu0 0.0
      %1605 = vmatprep.subr.mxu0 0.0
      %1606 = vmatpush1.msra.mxu0 0.0
      %1607 = vmatprep.subr.mxu0 0.0
      %1608 = vmatpush1.msra.mxu0 0.0
      %1609 = vmatprep.subr.mxu0 0.0
      %1610 = vmatpush1.msra.mxu0 0.0
      %1611 = vmatprep.subr.mxu0 0.0
      %1612 = vmatpush1.msra.mxu0 0.0
      %1613 = vmatprep.subr.mxu0 0.0
      %1614 = vmatpush1.msra.mxu0 0.0
      %1615 = vmatprep.subr.mxu0 0.0
      %1616 = vmatpush1.msra.mxu0 0.0
      %1617 = vmatprep.subr.mxu0 0.0
      %1618 = vmatpush1.msra.mxu0 0.0
      %1619 = vmatprep.mubr.f32.mxu0 0.0
      %1620 = vmatmul.mubr.f32.gmra.mrb[0].mxu0 %v1429
      %v1621 = vpop.f32.mrb[0].mxu0
      %v1622 = vadd.f32 %v1552, %v1621
      %v1623 = vpop.f32.mrb[0].mxu0
      %1624 = vdwg.mxu0
      %s1625 = scalar_lea.vmem [#allocation22], %s179
      %1626 = vst [vmem:[%s1625] sm:$0xff] %v1622
      %s1627 = sadd.s32 %s172, 1
      %p1628 = scmp.lt.s32.totalorder %s1627, 4
      %s1629 = scalar_select %p1628, %s1627, 4
      %p1630 = scmp.lt.s32.totalorder %s1627, 5
      %s1631 = sld [smem:[#allocation6 + %s1629]]
      %p1632 = scmp.eq.s32.totalorder %s1631, 0
      %p1633 = pnand %p1630, %p1632
      %p1634 = pneg %p1633
      // Predicated region
      $region101: #{tpu_custom_call.1} parent=97 // pred_check
        _
      $region102: #{tpu_custom_call.1} parent=97 // pred_check_branch
        %1636 = sbr.rel (%p1633) target = $region104
      $region103: #{tpu_custom_call.1} parent=97 // pred_region
        %vm1637 = vcmp.lt.s32.totalorder %v527, 40
        %v1638 = vsel %vm1637, %v1622, -1e+30
        %1639 = vmax.xlane.f32.xlu0 %v1638
        %v1640 = vpop.xlane.xlu0 %1639
        %vm1641 = vcmp.eq.f32.partialorder %v1638, %v1640
        %v1642 = vsel %vm1641, %v527, 128
        %v1643 = vand.u32 %v1642, 65535
        %v1644 = vshra.s32 %v1642, 16
        %v1645 = vcvt.s32.f32 %v1643
        %v1646 = vcvt.s32.f32 %v1644
        %1647 = vmin.xlane.f32.xlu0 %v1646
        %v1648 = vpop.xlane.xlu0 %1647
        %vm1649 = vcmp.eq.f32.partialorder %v1646, %v1648
        %v1650 = vsel %vm1649, %v1645, inf
        %1651 = vmin.xlane.f32.xlu0 %v1650
        %v1652 = vpop.xlane.xlu0 %1651
        %v1653 = vcvt.f32.s32 %v1652
        %v1654 = vcvt.f32.s32 %v1648
        %v1655 = vshll.u32 %v1654, 16
        %v1656 = vadd.s32 %v1655, %v1653
        %vm1657 = vcmp.eq.s32.totalorder %v527, %v1656
        %v1658 = vsel %vm1657, 1, 0
        %v1659 = vcvt.s32.f32 %v1658
        %v1660 = vld [vmem:[#allocation16] sm:$0xff]
        %v1661 = vld [vmem:[#allocation16 + $0x8] sm:$0xff]
        %v1662 = vld [vmem:[#allocation16 + $0x10] sm:$0xff]
        %v1663 = vld [vmem:[#allocation16 + $0x18] sm:$0xff]
        %v1664 = vld [vmem:[#allocation16 + $0x20] sm:$0xff]
        %v1665 = vld [vmem:[#allocation16 + $0x28] sm:$0xff]
        %v1666 = vld [vmem:[#allocation16 + $0x30] sm:$0xff]
        %v1667 = vld [vmem:[#allocation16 + $0x38] sm:$0xff]
        %v1668 = vld [vmem:[#allocation16 + $0x40] sm:$0xff]
        %v1669 = vld [vmem:[#allocation16 + $0x48] sm:$0xff]
        %v1670 = vld [vmem:[#allocation16 + $0x50] sm:$0xff]
        %v1671 = vld [vmem:[#allocation16 + $0x58] sm:$0xff]
        %v1672 = vld [vmem:[#allocation16 + $0x60] sm:$0xff]
        %v1673 = vld [vmem:[#allocation16 + $0x68] sm:$0xff]
        %v1674 = vld [vmem:[#allocation16 + $0x70] sm:$0xff]
        %v1675 = vld [vmem:[#allocation16 + $0x78] sm:$0xff]
        %1676 = vmatprep.subr.mxu0 0.0
        %1677 = vmatpush1.msra.mxu0 %v1660
        %1678 = vmatprep.subr.mxu0 0.0
        %1679 = vmatpush1.msra.mxu0 %v1661
        %1680 = vmatprep.subr.mxu0 0.0
        %1681 = vmatpush1.msra.mxu0 %v1662
        %1682 = vmatprep.subr.mxu0 0.0
        %1683 = vmatpush1.msra.mxu0 %v1663
        %1684 = vmatprep.subr.mxu0 0.0
        %1685 = vmatpush1.msra.mxu0 %v1664
        %1686 = vmatprep.subr.mxu0 0.0
        %1687 = vmatpush1.msra.mxu0 %v1665
        %1688 = vmatprep.subr.mxu0 0.0
        %1689 = vmatpush1.msra.mxu0 %v1666
        %1690 = vmatprep.subr.mxu0 0.0
        %1691 = vmatpush1.msra.mxu0 %v1667
        %1692 = vmatprep.subr.mxu0 0.0
        %1693 = vmatpush1.msra.mxu0 %v1668
        %1694 = vmatprep.subr.mxu0 0.0
        %1695 = vmatpush1.msra.mxu0 %v1669
        %1696 = vmatprep.subr.mxu0 0.0
        %1697 = vmatpush1.msra.mxu0 %v1670
        %1698 = vmatprep.subr.mxu0 0.0
        %1699 = vmatpush1.msra.mxu0 %v1671
        %1700 = vmatprep.subr.mxu0 0.0
        %1701 = vmatpush1.msra.mxu0 %v1672
        %1702 = vmatprep.subr.mxu0 0.0
        %1703 = vmatpush1.msra.mxu0 %v1673
        %1704 = vmatprep.subr.mxu0 0.0
        %1705 = vmatpush1.msra.mxu0 %v1674
        %1706 = vmatprep.subr.mxu0 0.0
        %1707 = vmatpush1.msra.mxu0 %v1675
        %1708 = vmatprep.subr.mxu0 0.0
        %1709 = vmatpush1.msra.mxu0 0.0
        %1710 = vmatprep.subr.mxu0 0.0
        %1711 = vmatpush1.msra.mxu0 0.0
        %1712 = vmatprep.subr.mxu0 0.0
        %1713 = vmatpush1.msra.mxu0 0.0
        %1714 = vmatprep.subr.mxu0 0.0
        %1715 = vmatpush1.msra.mxu0 0.0
        %1716 = vmatprep.subr.mxu0 0.0
        %1717 = vmatpush1.msra.mxu0 0.0
        %1718 = vmatprep.subr.mxu0 0.0
        %1719 = vmatpush1.msra.mxu0 0.0
        %1720 = vmatprep.subr.mxu0 0.0
        %1721 = vmatpush1.msra.mxu0 0.0
        %1722 = vmatprep.subr.mxu0 0.0
        %1723 = vmatpush1.msra.mxu0 0.0
        %1724 = vmatprep.subr.mxu0 0.0
        %1725 = vmatpush1.msra.mxu0 0.0
        %1726 = vmatprep.subr.mxu0 0.0
        %1727 = vmatpush1.msra.mxu0 0.0
        %1728 = vmatprep.subr.mxu0 0.0
        %1729 = vmatpush1.msra.mxu0 0.0
        %1730 = vmatprep.subr.mxu0 0.0
        %1731 = vmatpush1.msra.mxu0 0.0
        %1732 = vmatprep.subr.mxu0 0.0
        %1733 = vmatpush1.msra.mxu0 0.0
        %1734 = vmatprep.subr.mxu0 0.0
        %1735 = vmatpush1.msra.mxu0 0.0
        %1736 = vmatprep.subr.mxu0 0.0
        %1737 = vmatpush1.msra.mxu0 0.0
        %1738 = vmatprep.subr.mxu0 0.0
        %1739 = vmatpush1.msra.mxu0 0.0
        %1740 = vmatprep.mubr.f32.mxu0 0.0
        %1741 = vmatmul.mubr.f32.gmra.mrb[0].mxu0 %v1659
        %v1742 = vpop.f32.mrb[0].mxu0
        %v1743 = vadd.f32 0.0, %v1742
        %v1744 = vpop.f32.mrb[0].mxu0
        %1745 = vdwg.mxu0
        %1746 = vst [vmem:[#allocation4] sm:$0xff] %v1743
      $region104: #{tpu_custom_call.1} parent=97 // pred_fallthru
        _
    $region98: #{tpu_custom_call.1} parent=1 // loop_footer
      %s176 = sadd.s32 1, %s172
    $region99: #{tpu_custom_call.1} parent=1 // loop_footer_branch
      %171 = sbr.rel target = $region95
    $region100: #{tpu_custom_call.1} parent=1 // loop_exit
      _
    // Predicated region
    $region105: #{tpu_custom_call.1} parent=1 // pred_check
      _
    $region106: #{tpu_custom_call.1} parent=1 // pred_check_branch
      %1748 = sbr.rel (0) target = $region108
    $region107: #{tpu_custom_call.1} parent=1 // pred_region
      %s1750 = ssub.s32 640, 640
      %1751 = vsyncadd [#allocation8], %s1750
      %s1752 = sshll.u32 [#allocation22], 4
      %s1753 = int_to_ptr.vmem [resolvable:$true] %s1752
      %1758 = dma.vmem_to_hbm [thread:$0]  %s1753, 640, %s14, [#allocation8], 128, 128, 8
    $region108: #{tpu_custom_call.1} parent=1 // pred_fallthru
      _
    // Predicated region
    $region109: #{tpu_custom_call.1} parent=1 // pred_check
      _
    $region110: #{tpu_custom_call.1} parent=1 // pred_check_branch
      %1760 = sbr.rel (0) target = $region112
    $region111: #{tpu_custom_call.1} parent=1 // pred_region
      %1761 = dma.done [#allocation8], 640
    $region112: #{tpu_custom_call.1} parent=1 // pred_fallthru
      _
    %1762 = vsyncpa [#allocation7], 1
    %1763 = vsyncpa [#allocation12], 1
    %1764 = vsyncpa [#allocation15], 1
    %1765 = vsyncpa [#allocation18], 1
    %1766 = vsyncpa [#allocation21], 1
    %1767 = vsyncpa [#allocation8], 1
    %1768 = vsyncpa [#allocation9], 1

</llo_original>
